<compile_context>
chip_gen: v7x
topology: tpu7x:2x2x1
jax: 0.10.0
libtpu: 0.0.40
codegen_flags: <defaults>
</compile_context>

<pallas_src>
import functools
import math

import jax
import jax.numpy as jnp
from jax.experimental import pallas as pl
from jax.experimental.pallas import tpu as pltpu

_LN_EPS = 1e-5
_SQRT_2_OVER_PI = 0.7978845608028654
_LANE = 128
_VMEM_LIMIT = 48 * 1024 * 1024  # explicit scoped-VMEM budget (safe on v5e/v6e/v7x)


def _round_up(n, m):
    return ((n + m - 1) // m) * m


def _gelu_tanh(x):
    return 0.5 * x * (1.0 + jnp.tanh(_SQRT_2_OVER_PI * (x + 0.044715 * x * x * x)))


def _layer_norm(x, gamma, beta):
    mean = jnp.mean(x, axis=-1, keepdims=True)
    xc = x - mean
    var = jnp.mean(xc * xc, axis=-1, keepdims=True)
    return xc * jax.lax.rsqrt(var + _LN_EPS) * gamma + beta


# --------------------------------------------------------------------------
# Kernel 1: per-node LayerNorm + dense projection  (z1 = LN1(x) @ W1)
# Non-critical (O(N*c) bytes); kept simple, output already 128-lane dense.
# --------------------------------------------------------------------------
def _ln_matmul_kernel(x_ref, gamma_ref, beta_ref, w_ref, o_ref):
    h = _layer_norm(x_ref[...], gamma_ref[...], beta_ref[...])
    o_ref[...] = jnp.dot(
        h, w_ref[...], preferred_element_type=jnp.float32).astype(o_ref.dtype)


def _ln_matmul(x, gamma, beta, w, tile):
    n, c_in = x.shape
    c_out = w.shape[1]
    return pl.pallas_call(
        _ln_matmul_kernel,
        out_shape=jax.ShapeDtypeStruct((n, c_out), jnp.float32),
        grid=(n // tile,),
        in_specs=[
            pl.BlockSpec((tile, c_in), lambda i: (i, 0)),    # streamed rows
            pl.BlockSpec((1, c_in), lambda i: (0, 0)),       # resident
            pl.BlockSpec((1, c_in), lambda i: (0, 0)),       # resident
            pl.BlockSpec((c_in, c_out), lambda i: (0, 0)),   # resident weight
        ],
        out_specs=pl.BlockSpec((tile, c_out), lambda i: (i, 0)),
        compiler_params=pltpu.CompilerParams(
            dimension_semantics=("parallel",),
            vmem_limit_bytes=_VMEM_LIMIT),
    )(x, gamma, beta, w)


# --------------------------------------------------------------------------
# Kernel 2: fused  z2 = LN4( GELU( A_hat @ z1 + b1 ) ) @ W4_pad
#   - A_hat streamed in bf16 as (tile, tile) blocks over the (i, k) grid
#   - z1 fully VMEM-resident (index_map (0,0)); sliced with pl.ds per k
#   - f32 scratch accumulator; bias + GELU + LN4 + W4 fused in the epilogue
# --------------------------------------------------------------------------
def _agg_gelu_ln_matmul_kernel(a_ref, z_ref, b1_ref, g4_ref, be4_ref, w4_ref,
                               o_ref, acc_ref, *, tile):
    k = pl.program_id(1)

    @pl.when(k == 0)
    def _():
        acc_ref[...] = jnp.zeros_like(acc_ref)

    start = pl.multiple_of(k * tile, tile)
    z_blk = z_ref[pl.ds(start, tile), :]
    acc_ref[...] += jnp.dot(a_ref[...].astype(jnp.float32), z_blk,
                            preferred_element_type=jnp.float32)

    @pl.when(k == pl.num_programs(1) - 1)
    def _():
        h = _gelu_tanh(acc_ref[...] + b1_ref[...])
        h = _layer_norm(h, g4_ref[...], be4_ref[...])
        o_ref[...] = jnp.dot(
            h, w4_ref[...], preferred_element_type=jnp.float32).astype(o_ref.dtype)


def _agg_gelu_ln_matmul(a_hat, z1, b1, g4, be4, w4_pad, tile):
    n_pad = a_hat.shape[0]
    c_mid = z1.shape[1]
    c_out_pad = w4_pad.shape[1]
    kernel = functools.partial(_agg_gelu_ln_matmul_kernel, tile=tile)
    return pl.pallas_call(
        kernel,
        out_shape=jax.ShapeDtypeStruct((n_pad, c_out_pad), jnp.float32),
        grid=(n_pad // tile, n_pad // tile),
        in_specs=[
            pl.BlockSpec((tile, tile), lambda i, k: (i, k)),       # A_hat (bf16)
            pl.BlockSpec((n_pad, c_mid), lambda i, k: (0, 0)),     # z1 resident
            pl.BlockSpec((1, c_mid), lambda i, k: (0, 0)),         # b1 resident
            pl.BlockSpec((1, c_mid), lambda i, k: (0, 0)),         # ln4 gamma
            pl.BlockSpec((1, c_mid), lambda i, k: (0, 0)),         # ln4 beta
            pl.BlockSpec((c_mid, c_out_pad), lambda i, k: (0, 0)),  # W4 resident
        ],
        out_specs=pl.BlockSpec((tile, c_out_pad), lambda i, k: (i, 0)),
        scratch_shapes=[pltpu.VMEM((tile, c_mid), jnp.float32)],
        compiler_params=pltpu.CompilerParams(
            dimension_semantics=("parallel", "arbitrary"),
            vmem_limit_bytes=_VMEM_LIMIT),
    )(a_hat, z1, b1, g4, be4, w4_pad)


# --------------------------------------------------------------------------
# Kernel 3: out = A_hat @ z2 + b4_pad
#   - accumulates directly into the (VMEM-resident) output block; no scratch
#   - A_hat bf16 streamed; z2 VMEM-resident; lane-dense (128) output
# --------------------------------------------------------------------------
def _aggregate_kernel(a_ref, z_ref, b_ref, o_ref, *, tile):
    k = pl.program_id(1)

    @pl.when(k == 0)
    def _():
        o_ref[...] = jnp.zeros_like(o_ref)

    start = pl.multiple_of(k * tile, tile)
    o_ref[...] += jnp.dot(a_ref[...].astype(jnp.float32),
                          z_ref[pl.ds(start, tile), :],
                          preferred_element_type=jnp.float32)

    @pl.when(k == pl.num_programs(1) - 1)
    def _():
        o_ref[...] += b_ref[...]


def _aggregate_bias(a_hat, z, b_pad, tile):
    n_pad = a_hat.shape[0]
    c = z.shape[1]
    kernel = functools.partial(_aggregate_kernel, tile=tile)
    return pl.pallas_call(
        kernel,
        out_shape=jax.ShapeDtypeStruct((n_pad, c), jnp.float32),
        grid=(n_pad // tile, n_pad // tile),
        in_specs=[
            pl.BlockSpec((tile, tile), lambda i, k: (i, k)),   # A_hat (bf16)
            pl.BlockSpec((n_pad, c), lambda i, k: (0, 0)),     # z2 resident
            pl.BlockSpec((1, c), lambda i, k: (0, 0)),         # bias resident
        ],
        out_specs=pl.BlockSpec((tile, c), lambda i, k: (i, 0)),
        compiler_params=pltpu.CompilerParams(
            dimension_semantics=("parallel", "arbitrary"),
            vmem_limit_bytes=_VMEM_LIMIT),
    )(a_hat, z, b_pad)


# --------------------------------------------------------------------------
# Wrapper: adjacency normalization (pure JAX) + full GNO forward
# --------------------------------------------------------------------------
def build_gcn_adjacency(edge_index, num_nodes, padded_nodes, dtype=jnp.bfloat16):
    """Dense A_hat[target, source] = d_t^-1/2 d_s^-1/2 with self-loops added.

    Assumes edge_index contains no self-loops (matches PyG
    add_remaining_self_loops for that case). Returned in `dtype` (bf16 for the
    kernel's streaming path; values are normalized degrees in [0,1])."""
    src = edge_index[0]
    dst = edge_index[1]
    loops = jnp.arange(num_nodes, dtype=edge_index.dtype)
    src = jnp.concatenate([src, loops])
    dst = jnp.concatenate([dst, loops])
    w = jnp.ones(src.shape, jnp.float32)
    deg = jnp.zeros((num_nodes,), jnp.float32).at[dst].add(w)
    dinv = jnp.where(deg > 0, jax.lax.rsqrt(jnp.maximum(deg, 1e-12)), 0.0)
    norm = dinv[src] * dinv[dst]
    a_hat = jnp.zeros((padded_nodes, padded_nodes), jnp.float32)
    a_hat = a_hat.at[dst, src].add(norm)
    return a_hat.astype(dtype)


def _choose_tile(n, node_tile):
    """Largest 128-multiple tile <= node_tile, preferring >=2 row tiles so a
    v7x chip's two TensorCores both get work on the 'parallel' axis."""
    n128 = _round_up(n, _LANE)
    tile = min(node_tile, n128)
    if n128 > _LANE:
        max_for_two = (n128 // 2) // _LANE * _LANE
        if max_for_two >= _LANE:
            tile = min(tile, max_for_two)
    return max(tile, _LANE)


def gno_forward(x, edge_index, params, *, node_tile=512):
    assert node_tile % _LANE == 0
    n, _ = x.shape
    c_out = params["w4"].shape[1]
    tile = _choose_tile(n, node_tile)
    n_pad = _round_up(n, tile)

    # NOTE: padded (zero) rows of x yield nonzero z1 (= beta1 @ W1 after LN),
    # but padded *columns* of A_hat are zero so padded rows never contribute to
    # real outputs; the wrapper slices back to the first n rows at the end.
    x_p = jnp.pad(x, ((0, n_pad - n), (0, 0)))
    a_hat = build_gcn_adjacency(edge_index, n, n_pad)      # bf16, streamed twice

    # Lane-dense output path: pad c_out to a full 128-lane width.
    c_out_pad = _round_up(c_out, _LANE)
    w4_pad = jnp.pad(params["w4"], ((0, 0), (0, c_out_pad - c_out)))
    b4_pad = jnp.pad(params["b4"], ((0, 0), (0, c_out_pad - c_out)))

    z1 = _ln_matmul(x_p, params["ln1_gamma"], params["ln1_beta"],
                    params["w1"], tile)
    z2 = _agg_gelu_ln_matmul(a_hat, z1, params["b1"],
                             params["ln4_gamma"], params["ln4_beta"],
                             w4_pad, tile)
    out = _aggregate_bias(a_hat, z2, b4_pad, tile)
    return out[:n, :c_out]


# --------------------------------------------------------------------------
# Pure-JAX reference + synthetic init
# --------------------------------------------------------------------------
def gno_reference(x, edge_index, params, *, a_dtype=jnp.float32):
    n = x.shape[0]
    a_hat = build_gcn_adjacency(edge_index, n, n, dtype=a_dtype).astype(jnp.float32)
    h = _layer_norm(x, params["ln1_gamma"], params["ln1_beta"]) @ params["w1"]
    h = a_hat @ h + params["b1"]
    h = _gelu_tanh(h)
    h = _layer_norm(h, params["ln4_gamma"], params["ln4_beta"]) @ params["w4"]
    return a_hat @ h + params["b4"]


def init_params(key, c_in, c_mid, c_out):
    """Weights stored (in, out) so the kernel does plain x @ W (== x @ W_pt.T)."""
    ks = jax.random.split(key, 8)

    def glorot(k, fi, fo):
        lim = math.sqrt(6.0 / (fi + fo))
        return jax.random.uniform(k, (fi, fo), jnp.float32, -lim, lim)

    return dict(
        ln1_gamma=1.0 + 0.1 * jax.random.normal(ks[0], (1, c_in), jnp.float32),
        ln1_beta=0.1 * jax.random.normal(ks[1], (1, c_in), jnp.float32),
        w1=glorot(ks[2], c_in, c_mid),
        b1=0.1 * jax.random.normal(ks[3], (1, c_mid), jnp.float32),
        ln4_gamma=1.0 + 0.1 * jax.random.normal(ks[4], (1, c_mid), jnp.float32),
        ln4_beta=0.1 * jax.random.normal(ks[5], (1, c_mid), jnp.float32),
        w4=glorot(ks[6], c_mid, c_out),
        b4=0.1 * jax.random.normal(ks[7], (1, c_out), jnp.float32),
    )


if __name__ == "__main__":
    key = jax.random.PRNGKey(0)
    k_x, k_p = jax.random.split(key)

    # Small shapes consistent with the module: N graph nodes, feature channels.
    N, in_channels, mid_channels, out_channels = 64, 16, 128, 16

    x = jax.random.normal(k_x, (N, in_channels), jnp.float32)

    # Deterministic symmetric ring graph (no self-loops), edge_index (2, E).
    idx = jnp.arange(N, dtype=jnp.int32)
    nxt = (idx + 1) % N
    edge_index = jnp.stack(
        [jnp.concatenate([idx, nxt]), jnp.concatenate([nxt, idx])])

    params = init_params(k_p, in_channels, mid_channels, out_channels)

    out = jax.jit(gno_forward)(x, edge_index, params)
    out = jax.block_until_ready(out)
    assert out.shape == (N, out_channels)

    # Tight check vs. a reference using the same bf16-quantized A_hat
    # (validates the fused-kernel mechanics exactly).
    ref_q = gno_reference(x, edge_index, params, a_dtype=jnp.bfloat16)
    err_q = float(jnp.max(jnp.abs(out - ref_q)))
    assert jnp.allclose(out, ref_q, atol=2e-3, rtol=2e-3), err_q

    # Looser sanity check vs. the full-f32 reference: bounds the bf16 A_hat
    # streaming error (f32 accumulation is kept everywhere).
    ref_f = gno_reference(x, edge_index, params, a_dtype=jnp.float32)
    err_f = float(jnp.max(jnp.abs(out - ref_f)))
    assert jnp.allclose(out, ref_f, atol=2e-2, rtol=2e-2), err_f

    print("KERNEL_OK")
</pallas_src>

<mosaic_0001>
module attributes {stable_mosaic.version = 11 : i64} {
  func.func private @main(%arg0: i32) attributes {dimension_semantics = [#tpu.dimension_semantics<core_parallel>], iteration_bounds = array<i64: 2>, tpu.core_type = #tpu.core_type<sc_scalar_subcore>, window_params = []} {
    return
  }
}

module attributes {stable_mosaic.version = 11 : i64} {
  func.func private @main(%arg0: i32) attributes {dimension_semantics = [#tpu.dimension_semantics<core_parallel>], iteration_bounds = array<i64: 2>, tpu.core_type = #tpu.core_type<sc_scalar_subcore>, window_params = []} {
    return
  }
}

module attributes {stable_mosaic.version = 11 : i64} {
  func.func @_ln_matmul_kernel(%arg0: i32, %arg1: memref<128x16xf32, #tpu.memory_space<vmem>>, %arg2: memref<1x16xf32, #tpu.memory_space<vmem>>, %arg3: memref<1x16xf32, #tpu.memory_space<vmem>>, %arg4: memref<16x128xf32, #tpu.memory_space<vmem>>, %arg5: memref<128x128xf32, #tpu.memory_space<vmem>>) attributes {dimension_semantics = [#tpu.dimension_semantics<parallel>], iteration_bounds = array<i64: 1>, scalar_prefetch = 0 : i64, scratch_operands = 0 : i64, tpu.core_type = #tpu.core_type<tc>, window_params = [{transform_indices = @transform_0, window_bounds = array<i64: 128, 16>}, {pipeline_mode = #tpu.pipeline_mode<synchronous>, transform_indices = @transform_1, window_bounds = array<i64: 1, 16>}, {pipeline_mode = #tpu.pipeline_mode<synchronous>, transform_indices = @transform_2, window_bounds = array<i64: 1, 16>}, {pipeline_mode = #tpu.pipeline_mode<synchronous>, transform_indices = @transform_3, window_bounds = array<i64: 16, 128>}, {transform_indices = @transform_4, window_bounds = array<i64: 128, 128>}]} {
    %c0 = arith.constant 0 : index
    %c0_0 = arith.constant 0 : index
    %0 = vector.load %arg1[%c0, %c0_0] : memref<128x16xf32, #tpu.memory_space<vmem>>, vector<128x16xf32>
    %c0_1 = arith.constant 0 : index
    %c0_2 = arith.constant 0 : index
    %1 = vector.load %arg2[%c0_1, %c0_2] : memref<1x16xf32, #tpu.memory_space<vmem>>, vector<1x16xf32>
    %c0_3 = arith.constant 0 : index
    %c0_4 = arith.constant 0 : index
    %2 = vector.load %arg3[%c0_3, %c0_4] : memref<1x16xf32, #tpu.memory_space<vmem>>, vector<1x16xf32>
    %cst = arith.constant dense<0.000000e+00> : vector<128xf32>
    %3 = vector.multi_reduction <add>, %0, %cst [1] : vector<128x16xf32> to vector<128xf32>
    %4 = vector.shape_cast %3 : vector<128xf32> to vector<128x1xf32>
    %cst_5 = arith.constant 1.600000e+01 : f32
    %5 = vector.broadcast %cst_5 : f32 to vector<128x1xf32>
    %6 = arith.divf %4, %5 : vector<128x1xf32>
    %7 = vector.broadcast %6 : vector<128x1xf32> to vector<128x16xf32>
    %8 = arith.subf %0, %7 : vector<128x16xf32>
    %9 = arith.mulf %8, %8 : vector<128x16xf32>
    %cst_6 = arith.constant dense<0.000000e+00> : vector<128xf32>
    %10 = vector.multi_reduction <add>, %9, %cst_6 [1] : vector<128x16xf32> to vector<128xf32>
    %11 = vector.shape_cast %10 : vector<128xf32> to vector<128x1xf32>
    %cst_7 = arith.constant 1.600000e+01 : f32
    %12 = vector.broadcast %cst_7 : f32 to vector<128x1xf32>
    %13 = arith.divf %11, %12 : vector<128x1xf32>
    %cst_8 = arith.constant 9.99999974E-6 : f32
    %14 = vector.broadcast %cst_8 : f32 to vector<128x1xf32>
    %15 = arith.addf %13, %14 : vector<128x1xf32>
    %16 = math.rsqrt %15 : vector<128x1xf32>
    %17 = vector.broadcast %16 : vector<128x1xf32> to vector<128x16xf32>
    %18 = arith.mulf %8, %17 : vector<128x16xf32>
    %19 = vector.broadcast %1 : vector<1x16xf32> to vector<128x16xf32>
    %20 = arith.mulf %18, %19 : vector<128x16xf32>
    %21 = vector.broadcast %2 : vector<1x16xf32> to vector<128x16xf32>
    %22 = arith.addf %20, %21 : vector<128x16xf32>
    %c0_9 = arith.constant 0 : index
    %c0_10 = arith.constant 0 : index
    %23 = vector.load %arg4[%c0_9, %c0_10] : memref<16x128xf32, #tpu.memory_space<vmem>>, vector<16x128xf32>
    %cst_11 = arith.constant dense<0.000000e+00> : vector<128x128xf32>
    %24 = tpu.matmul %22, %23, %cst_11 {dimension_numbers = #tpu.dot_dimension_numbers<[1], [0], [0], [1], [0, 0, 1, 1], [], []>} : vector<128x16xf32>, vector<16x128xf32>, vector<128x128xf32> -> vector<128x128xf32>
    %c0_12 = arith.constant 0 : index
    %c0_13 = arith.constant 0 : index
    %25 = vector.load %arg5[%c0_12, %c0_13] : memref<128x128xf32, #tpu.memory_space<vmem>>, vector<128x128xf32>
    tpu.vector_store %arg5[%c0_12, %c0_13], %24 {strides = array<i32>} : memref<128x128xf32, #tpu.memory_space<vmem>>, vector<128x128xf32>,
    return
  }
  func.func @transform_0(%arg0: i32) -> (i32, i32) {
    %c0_i32 = arith.constant 0 : i32
    %c0_i32_0 = arith.constant 0 : i32
    return %arg0, %c0_i32 : i32, i32
  }
  func.func @transform_1(%arg0: i32) -> (i32, i32) {
    %c0_i32 = arith.constant 0 : i32
    %c0_i32_0 = arith.constant 0 : i32
    %c0_i32_1 = arith.constant 0 : i32
    return %c0_i32, %c0_i32_0 : i32, i32
  }
  func.func @transform_2(%arg0: i32) -> (i32, i32) {
    %c0_i32 = arith.constant 0 : i32
    %c0_i32_0 = arith.constant 0 : i32
    %c0_i32_1 = arith.constant 0 : i32
    return %c0_i32, %c0_i32_0 : i32, i32
  }
  func.func @transform_3(%arg0: i32) -> (i32, i32) {
    %c0_i32 = arith.constant 0 : i32
    %c0_i32_0 = arith.constant 0 : i32
    %c0_i32_1 = arith.constant 0 : i32
    return %c0_i32, %c0_i32_0 : i32, i32
  }
  func.func @transform_4(%arg0: i32) -> (i32, i32) {
    %c0_i32 = arith.constant 0 : i32
    %c0_i32_0 = arith.constant 0 : i32
    return %arg0, %c0_i32 : i32, i32
  }
}

module attributes {stable_mosaic.version = 11 : i64} {
  func.func @_agg_gelu_ln_matmul_kernel(%arg0: i32, %arg1: i32, %arg2: memref<128x128xbf16, #tpu.memory_space<vmem>>, %arg3: memref<128x128xf32, #tpu.memory_space<vmem>>, %arg4: memref<1x128xf32, #tpu.memory_space<vmem>>, %arg5: memref<1x128xf32, #tpu.memory_space<vmem>>, %arg6: memref<1x128xf32, #tpu.memory_space<vmem>>, %arg7: memref<128x128xf32, #tpu.memory_space<vmem>>, %arg8: memref<128x128xf32, #tpu.memory_space<vmem>>, %arg9: memref<128x128xf32, #tpu.memory_space<vmem>>) attributes {dimension_semantics = [#tpu.dimension_semantics<parallel>, #tpu.dimension_semantics<arbitrary>], iteration_bounds = array<i64: 1, 1>, scalar_prefetch = 0 : i64, scratch_operands = 1 : i64, tpu.core_type = #tpu.core_type<tc>, window_params = [{transform_indices = @transform_0, window_bounds = array<i64: 128, 128>}, {pipeline_mode = #tpu.pipeline_mode<synchronous>, transform_indices = @transform_1, window_bounds = array<i64: 128, 128>}, {pipeline_mode = #tpu.pipeline_mode<synchronous>, transform_indices = @transform_2, window_bounds = array<i64: 1, 128>}, {pipeline_mode = #tpu.pipeline_mode<synchronous>, transform_indices = @transform_3, window_bounds = array<i64: 1, 128>}, {pipeline_mode = #tpu.pipeline_mode<synchronous>, transform_indices = @transform_4, window_bounds = array<i64: 1, 128>}, {pipeline_mode = #tpu.pipeline_mode<synchronous>, transform_indices = @transform_5, window_bounds = array<i64: 128, 128>}, {transform_indices = @transform_6, window_bounds = array<i64: 128, 128>}]} {
    %c0_i32 = arith.constant 0 : i32
    %0 = arith.cmpi eq, %arg1, %c0_i32 : i32
    %1 = arith.extui %0 : i1 to i32
    %c0_i32_0 = arith.constant 0 : i32
    %2 = arith.cmpi ne, %1, %c0_i32_0 : i32
    scf.if %2 {
      %cst_9 = arith.constant 0.000000e+00 : f32
      %16 = vector.broadcast %cst_9 : f32 to vector<128x128xf32>
      %c0_10 = arith.constant 0 : index
      %c0_11 = arith.constant 0 : index
      %17 = vector.load %arg9[%c0_10, %c0_11] : memref<128x128xf32, #tpu.memory_space<vmem>>, vector<128x128xf32>
      tpu.vector_store %arg9[%c0_10, %c0_11], %16 {strides = array<i32>} : memref<128x128xf32, #tpu.memory_space<vmem>>, vector<128x128xf32>,
    } else {
    }
    %c128_i32 = arith.constant 128 : i32
    %3 = arith.muli %arg1, %c128_i32 : i32
    %4 = tpu.assume_multiple %3, 128 : i32
    %5 = arith.index_cast %4 : i32 to index
    %c0 = arith.constant 0 : index
    %6 = vector.load %arg3[%5, %c0] : memref<128x128xf32, #tpu.memory_space<vmem>>, vector<128x128xf32>
    %c0_1 = arith.constant 0 : index
    %c0_2 = arith.constant 0 : index
    %7 = vector.load %arg9[%c0_1, %c0_2] : memref<128x128xf32, #tpu.memory_space<vmem>>, vector<128x128xf32>
    %c0_3 = arith.constant 0 : index
    %c0_4 = arith.constant 0 : index
    %8 = vector.load %arg2[%c0_3, %c0_4] : memref<128x128xbf16, #tpu.memory_space<vmem>>, vector<128x128xbf16>
    %9 = arith.extf %8 : vector<128x128xbf16> to vector<128x128xf32>
    %cst = arith.constant dense<0.000000e+00> : vector<128x128xf32>
    %10 = tpu.matmul %9, %6, %cst {dimension_numbers = #tpu.dot_dimension_numbers<[1], [0], [0], [1], [0, 0, 1, 1], [], []>} : vector<128x128xf32>, vector<128x128xf32>, vector<128x128xf32> -> vector<128x128xf32>
    %11 = arith.addf %7, %10 : vector<128x128xf32>
    %c0_5 = arith.constant 0 : index
    %c0_6 = arith.constant 0 : index
    %12 = vector.load %arg9[%c0_5, %c0_6] : memref<128x128xf32, #tpu.memory_space<vmem>>, vector<128x128xf32>
    tpu.vector_store %arg9[%c0_5, %c0_6], %11 {strides = array<i32>} : memref<128x128xf32, #tpu.memory_space<vmem>>, vector<128x128xf32>,
    %c0_i32_7 = arith.constant 0 : i32
    %13 = arith.cmpi eq, %arg1, %c0_i32_7 : i32
    %14 = arith.extui %13 : i1 to i32
    %c0_i32_8 = arith.constant 0 : i32
    %15 = arith.cmpi ne, %14, %c0_i32_8 : i32
    scf.if %15 {
      %c0_9 = arith.constant 0 : index
      %c0_10 = arith.constant 0 : index
      %16 = vector.load %arg9[%c0_9, %c0_10] : memref<128x128xf32, #tpu.memory_space<vmem>>, vector<128x128xf32>
      %c0_11 = arith.constant 0 : index
      %c0_12 = arith.constant 0 : index
      %17 = vector.load %arg4[%c0_11, %c0_12] : memref<1x128xf32, #tpu.memory_space<vmem>>, vector<1x128xf32>
      %18 = vector.broadcast %17 : vector<1x128xf32> to vector<128x128xf32>
      %19 = arith.addf %16, %18 : vector<128x128xf32>
      %cst_13 = arith.constant 5.000000e-01 : f32
      %20 = vector.broadcast %cst_13 : f32 to vector<128x128xf32>
      %21 = arith.mulf %20, %19 : vector<128x128xf32>
      %cst_14 = arith.constant 4.471500e-02 : f32
      %22 = vector.broadcast %cst_14 : f32 to vector<128x128xf32>
      %23 = arith.mulf %22, %19 : vector<128x128xf32>
      %24 = arith.mulf %23, %19 : vector<128x128xf32>
      %25 = arith.mulf %24, %19 : vector<128x128xf32>
      %26 = arith.addf %19, %25 : vector<128x128xf32>
      %cst_15 = arith.constant 0.797884583 : f32
      %27 = vector.broadcast %cst_15 : f32 to vector<128x128xf32>
      %28 = arith.mulf %27, %26 : vector<128x128xf32>
      %29 = math.tanh %28 : vector<128x128xf32>
      %cst_16 = arith.constant 1.000000e+00 : f32
      %30 = vector.broadcast %cst_16 : f32 to vector<128x128xf32>
      %31 = arith.addf %30, %29 : vector<128x128xf32>
      %32 = arith.mulf %21, %31 : vector<128x128xf32>
      %c0_17 = arith.constant 0 : index
      %c0_18 = arith.constant 0 : index
      %33 = vector.load %arg5[%c0_17, %c0_18] : memref<1x128xf32, #tpu.memory_space<vmem>>, vector<1x128xf32>
      %c0_19 = arith.constant 0 : index
      %c0_20 = arith.constant 0 : index
      %34 = vector.load %arg6[%c0_19, %c0_20] : memref<1x128xf32, #tpu.memory_space<vmem>>, vector<1x128xf32>
      %cst_21 = arith.constant dense<0.000000e+00> : vector<128xf32>
      %35 = vector.multi_reduction <add>, %32, %cst_21 [1] : vector<128x128xf32> to vector<128xf32>
      %36 = vector.shape_cast %35 : vector<128xf32> to vector<128x1xf32>
      %cst_22 = arith.constant 1.280000e+02 : f32
      %37 = vector.broadcast %cst_22 : f32 to vector<128x1xf32>
      %38 = arith.divf %36, %37 : vector<128x1xf32>
      %39 = vector.broadcast %38 : vector<128x1xf32> to vector<128x128xf32>
      %40 = arith.subf %32, %39 : vector<128x128xf32>
      %41 = arith.mulf %40, %40 : vector<128x128xf32>
      %cst_23 = arith.constant dense<0.000000e+00> : vector<128xf32>
      %42 = vector.multi_reduction <add>, %41, %cst_23 [1] : vector<128x128xf32> to vector<128xf32>
      %43 = vector.shape_cast %42 : vector<128xf32> to vector<128x1xf32>
      %cst_24 = arith.constant 1.280000e+02 : f32
      %44 = vector.broadcast %cst_24 : f32 to vector<128x1xf32>
      %45 = arith.divf %43, %44 : vector<128x1xf32>
      %cst_25 = arith.constant 9.99999974E-6 : f32
      %46 = vector.broadcast %cst_25 : f32 to vector<128x1xf32>
      %47 = arith.addf %45, %46 : vector<128x1xf32>
      %48 = math.rsqrt %47 : vector<128x1xf32>
      %49 = vector.broadcast %48 : vector<128x1xf32> to vector<128x128xf32>
      %50 = arith.mulf %40, %49 : vector<128x128xf32>
      %51 = vector.broadcast %33 : vector<1x128xf32> to vector<128x128xf32>
      %52 = arith.mulf %50, %51 : vector<128x128xf32>
      %53 = vector.broadcast %34 : vector<1x128xf32> to vector<128x128xf32>
      %54 = arith.addf %52, %53 : vector<128x128xf32>
      %c0_26 = arith.constant 0 : index
      %c0_27 = arith.constant 0 : index
      %55 = vector.load %arg7[%c0_26, %c0_27] : memref<128x128xf32, #tpu.memory_space<vmem>>, vector<128x128xf32>
      %cst_28 = arith.constant dense<0.000000e+00> : vector<128x128xf32>
      %56 = tpu.matmul %54, %55, %cst_28 {dimension_numbers = #tpu.dot_dimension_numbers<[1], [0], [0], [1], [0, 0, 1, 1], [], []>} : vector<128x128xf32>, vector<128x128xf32>, vector<128x128xf32> -> vector<128x128xf32>
      %c0_29 = arith.constant 0 : index
      %c0_30 = arith.constant 0 : index
      %57 = vector.load %arg8[%c0_29, %c0_30] : memref<128x128xf32, #tpu.memory_space<vmem>>, vector<128x128xf32>
      tpu.vector_store %arg8[%c0_29, %c0_30], %56 {strides = array<i32>} : memref<128x128xf32, #tpu.memory_space<vmem>>, vector<128x128xf32>,
    } else {
    }
    return
  }
  func.func @transform_0(%arg0: i32, %arg1: i32) -> (i32, i32) {
    %c0_i32 = arith.constant 0 : i32
    return %arg0, %arg1 : i32, i32
  }
  func.func @transform_1(%arg0: i32, %arg1: i32) -> (i32, i32) {
    %c0_i32 = arith.constant 0 : i32
    %c0_i32_0 = arith.constant 0 : i32
    %c0_i32_1 = arith.constant 0 : i32
    return %c0_i32, %c0_i32_0 : i32, i32
  }
  func.func @transform_2(%arg0: i32, %arg1: i32) -> (i32, i32) {
    %c0_i32 = arith.constant 0 : i32
    %c0_i32_0 = arith.constant 0 : i32
    %c0_i32_1 = arith.constant 0 : i32
    return %c0_i32, %c0_i32_0 : i32, i32
  }
  func.func @transform_3(%arg0: i32, %arg1: i32) -> (i32, i32) {
    %c0_i32 = arith.constant 0 : i32
    %c0_i32_0 = arith.constant 0 : i32
    %c0_i32_1 = arith.constant 0 : i32
    return %c0_i32, %c0_i32_0 : i32, i32
  }
  func.func @transform_4(%arg0: i32, %arg1: i32) -> (i32, i32) {
    %c0_i32 = arith.constant 0 : i32
    %c0_i32_0 = arith.constant 0 : i32
    %c0_i32_1 = arith.constant 0 : i32
    return %c0_i32, %c0_i32_0 : i32, i32
  }
  func.func @transform_5(%arg0: i32, %arg1: i32) -> (i32, i32) {
    %c0_i32 = arith.constant 0 : i32
    %c0_i32_0 = arith.constant 0 : i32
    %c0_i32_1 = arith.constant 0 : i32
    return %c0_i32, %c0_i32_0 : i32, i32
  }
  func.func @transform_6(%arg0: i32, %arg1: i32) -> (i32, i32) {
    %c0_i32 = arith.constant 0 : i32
    %c0_i32_0 = arith.constant 0 : i32
    return %arg0, %c0_i32 : i32, i32
  }
}

module attributes {stable_mosaic.version = 11 : i64} {
  func.func @_aggregate_kernel(%arg0: i32, %arg1: i32, %arg2: memref<128x128xbf16, #tpu.memory_space<vmem>>, %arg3: memref<128x128xf32, #tpu.memory_space<vmem>>, %arg4: memref<1x128xf32, #tpu.memory_space<vmem>>, %arg5: memref<128x128xf32, #tpu.memory_space<vmem>>) attributes {dimension_semantics = [#tpu.dimension_semantics<parallel>, #tpu.dimension_semantics<arbitrary>], iteration_bounds = array<i64: 1, 1>, scalar_prefetch = 0 : i64, scratch_operands = 0 : i64, tpu.core_type = #tpu.core_type<tc>, window_params = [{transform_indices = @transform_0, window_bounds = array<i64: 128, 128>}, {pipeline_mode = #tpu.pipeline_mode<synchronous>, transform_indices = @transform_1, window_bounds = array<i64: 128, 128>}, {pipeline_mode = #tpu.pipeline_mode<synchronous>, transform_indices = @transform_2, window_bounds = array<i64: 1, 128>}, {transform_indices = @transform_3, window_bounds = array<i64: 128, 128>}]} {
    %c0_i32 = arith.constant 0 : i32
    %0 = arith.cmpi eq, %arg1, %c0_i32 : i32
    %1 = arith.extui %0 : i1 to i32
    %c0_i32_0 = arith.constant 0 : i32
    %2 = arith.cmpi ne, %1, %c0_i32_0 : i32
    scf.if %2 {
      %cst_9 = arith.constant 0.000000e+00 : f32
      %16 = vector.broadcast %cst_9 : f32 to vector<128x128xf32>
      %c0_10 = arith.constant 0 : index
      %c0_11 = arith.constant 0 : index
      %17 = vector.load %arg5[%c0_10, %c0_11] : memref<128x128xf32, #tpu.memory_space<vmem>>, vector<128x128xf32>
      tpu.vector_store %arg5[%c0_10, %c0_11], %16 {strides = array<i32>} : memref<128x128xf32, #tpu.memory_space<vmem>>, vector<128x128xf32>,
    } else {
    }
    %c128_i32 = arith.constant 128 : i32
    %3 = arith.muli %arg1, %c128_i32 : i32
    %4 = tpu.assume_multiple %3, 128 : i32
    %c0 = arith.constant 0 : index
    %c0_1 = arith.constant 0 : index
    %5 = vector.load %arg5[%c0, %c0_1] : memref<128x128xf32, #tpu.memory_space<vmem>>, vector<128x128xf32>
    %c0_2 = arith.constant 0 : index
    %c0_3 = arith.constant 0 : index
    %6 = vector.load %arg2[%c0_2, %c0_3] : memref<128x128xbf16, #tpu.memory_space<vmem>>, vector<128x128xbf16>
    %7 = arith.extf %6 : vector<128x128xbf16> to vector<128x128xf32>
    %8 = arith.index_cast %4 : i32 to index
    %c0_4 = arith.constant 0 : index
    %9 = vector.load %arg3[%8, %c0_4] : memref<128x128xf32, #tpu.memory_space<vmem>>, vector<128x128xf32>
    %cst = arith.constant dense<0.000000e+00> : vector<128x128xf32>
    %10 = tpu.matmul %7, %9, %cst {dimension_numbers = #tpu.dot_dimension_numbers<[1], [0], [0], [1], [0, 0, 1, 1], [], []>} : vector<128x128xf32>, vector<128x128xf32>, vector<128x128xf32> -> vector<128x128xf32>
    %11 = arith.addf %5, %10 : vector<128x128xf32>
    %c0_5 = arith.constant 0 : index
    %c0_6 = arith.constant 0 : index
    %12 = vector.load %arg5[%c0_5, %c0_6] : memref<128x128xf32, #tpu.memory_space<vmem>>, vector<128x128xf32>
    tpu.vector_store %arg5[%c0_5, %c0_6], %11 {strides = array<i32>} : memref<128x128xf32, #tpu.memory_space<vmem>>, vector<128x128xf32>,
    %c0_i32_7 = arith.constant 0 : i32
    %13 = arith.cmpi eq, %arg1, %c0_i32_7 : i32
    %14 = arith.extui %13 : i1 to i32
    %c0_i32_8 = arith.constant 0 : i32
    %15 = arith.cmpi ne, %14, %c0_i32_8 : i32
    scf.if %15 {
      %c0_9 = arith.constant 0 : index
      %c0_10 = arith.constant 0 : index
      %16 = vector.load %arg5[%c0_9, %c0_10] : memref<128x128xf32, #tpu.memory_space<vmem>>, vector<128x128xf32>
      %c0_11 = arith.constant 0 : index
      %c0_12 = arith.constant 0 : index
      %17 = vector.load %arg4[%c0_11, %c0_12] : memref<1x128xf32, #tpu.memory_space<vmem>>, vector<1x128xf32>
      %18 = vector.broadcast %17 : vector<1x128xf32> to vector<128x128xf32>
      %19 = arith.addf %16, %18 : vector<128x128xf32>
      %c0_13 = arith.constant 0 : index
      %c0_14 = arith.constant 0 : index
      %20 = vector.load %arg5[%c0_13, %c0_14] : memref<128x128xf32, #tpu.memory_space<vmem>>, vector<128x128xf32>
      tpu.vector_store %arg5[%c0_13, %c0_14], %19 {strides = array<i32>} : memref<128x128xf32, #tpu.memory_space<vmem>>, vector<128x128xf32>,
    } else {
    }
    return
  }
  func.func @transform_0(%arg0: i32, %arg1: i32) -> (i32, i32) {
    %c0_i32 = arith.constant 0 : i32
    return %arg0, %arg1 : i32, i32
  }
  func.func @transform_1(%arg0: i32, %arg1: i32) -> (i32, i32) {
    %c0_i32 = arith.constant 0 : i32
    %c0_i32_0 = arith.constant 0 : i32
    %c0_i32_1 = arith.constant 0 : i32
    return %c0_i32, %c0_i32_0 : i32, i32
  }
  func.func @transform_2(%arg0: i32, %arg1: i32) -> (i32, i32) {
    %c0_i32 = arith.constant 0 : i32
    %c0_i32_0 = arith.constant 0 : i32
    %c0_i32_1 = arith.constant 0 : i32
    return %c0_i32, %c0_i32_0 : i32, i32
  }
  func.func @transform_3(%arg0: i32, %arg1: i32) -> (i32, i32) {
    %c0_i32 = arith.constant 0 : i32
    %c0_i32_0 = arith.constant 0 : i32
    return %arg0, %c0_i32 : i32, i32
  }
}

</mosaic_0001>

<llo_original>
// kernel: mul.1
$region0: #{mul.1}
  #allocation0 [shape = 's32[1]{0}', space=sflag, size = 0x4, scoped, tag = 'scoped memory for mul.1']
  %s0 = inlined_call_operand.vmem [shape: f32[192], index: 0, kind: input, shape index: {}]
  %s1 = inlined_call_operand.vmem [shape: f32[192], index: 1, kind: input, shape index: {}]
  %s2 = inlined_call_operand.vmem [shape: f32[192], index: 2, kind: output, shape index: {}]
  %v3 = vld [vmem:[%s0] sm:$0x3]
  %v4 = vld [vmem:[%s1] sm:$0x3]
  %5 = xla_tuple %v3, %v4
  %6 = xla_tuple %5
  %v7 = vmul.f32 %v3, %v4
  %8 = xla_tuple %v7
  %9 = vst [vmem:[%s2] sm:$0x3] %v7

// kernel: gno_forward.3
$region0: #{gno_forward.3}
  #allocation0 [shape = 'u32[]', space=smem, size = 0x4, offset = 0x4, fixed_abs, tag = 'smem constant byte address 0x4 - core index']
  #allocation1 [shape = 'u32[144,128]{1,0:T(1,128)}', space=vmem, size = 0x12000, scoped, tag = 'internal scratch']
  %s0 = inlined_call_operand.vmem [shape: f32[128,16], index: 0, kind: input, shape index: {}]
  %s1 = inlined_call_operand.vmem [shape: f32[1,16], index: 1, kind: input, shape index: {}]
  %s2 = inlined_call_operand.vmem [shape: f32[1,16], index: 2, kind: input, shape index: {}]
  %s3 = inlined_call_operand.vmem [shape: f32[16,128], index: 3, kind: input, shape index: {}]
  %s4 = inlined_call_operand.vmem [shape: f32[128,128], index: 4, kind: output, shape index: {}]
  %s5 = sld [smem:[#allocation0]]
  $region26: #{gno_forward.3} parent=0
    _
  %s7 = ssub.s32 1, %s5
  %s8 = scalar_select 0, %s7, %s5
  // Predicated region
  $region2: #{gno_forward.3} parent=0 // pred_check
    _
  $region3: #{gno_forward.3} parent=0 // pred_check_branch
    %10 = sbr.rel (0) target = $region5
  $region4: #{gno_forward.3} parent=0 // pred_region
    _
  $region5: #{gno_forward.3} parent=0 // pred_fallthru
    _
  // Predicated region
  $region6: #{gno_forward.3} parent=0 // pred_check
    _
  $region7: #{gno_forward.3} parent=0 // pred_check_branch
    %12 = sbr.rel (0) target = $region9
  $region8: #{gno_forward.3} parent=0 // pred_region
    _
  $region9: #{gno_forward.3} parent=0 // pred_fallthru
    _
  // Predicated region
  $region10: #{gno_forward.3} parent=0 // pred_check
    _
  $region11: #{gno_forward.3} parent=0 // pred_check_branch
    %14 = sbr.rel (0) target = $region13
  $region12: #{gno_forward.3} parent=0 // pred_region
    _
  $region13: #{gno_forward.3} parent=0 // pred_fallthru
    _
  // Predicated region
  $region14: #{gno_forward.3} parent=0 // pred_check
    _
  $region15: #{gno_forward.3} parent=0 // pred_check_branch
    %16 = sbr.rel (0) target = $region17
  $region16: #{gno_forward.3} parent=0 // pred_region
    _
  $region17: #{gno_forward.3} parent=0 // pred_fallthru
    _
  %v17 = vld [vmem:[%s0] sm:$0xff]
  %v18 = vld [vmem:[%s0 + $0x8] sm:$0xff]
  %v19 = vld [vmem:[%s0 + $0x10] sm:$0xff]
  %v20 = vld [vmem:[%s0 + $0x18] sm:$0xff]
  %v21 = vld [vmem:[%s0 + $0x20] sm:$0xff]
  %v22 = vld [vmem:[%s0 + $0x28] sm:$0xff]
  %v23 = vld [vmem:[%s0 + $0x30] sm:$0xff]
  %v24 = vld [vmem:[%s0 + $0x38] sm:$0xff]
  %v25 = vld [vmem:[%s0 + $0x40] sm:$0xff]
  %v26 = vld [vmem:[%s0 + $0x48] sm:$0xff]
  %v27 = vld [vmem:[%s0 + $0x50] sm:$0xff]
  %v28 = vld [vmem:[%s0 + $0x58] sm:$0xff]
  %v29 = vld [vmem:[%s0 + $0x60] sm:$0xff]
  %v30 = vld [vmem:[%s0 + $0x68] sm:$0xff]
  %v31 = vld [vmem:[%s0 + $0x70] sm:$0xff]
  %v32 = vld [vmem:[%s0 + $0x78] sm:$0xff]
  %v33 = vld [vmem:[%s1] sm:$0x1]
  %v34 = vld [vmem:[%s2] sm:$0x1]
  %vm35 = vcmask 130048
  %v36 = vsel %vm35, %v17, 0.0
  %37 = vadd.xlane.f32.xlu0 %v36
  %v38 = vpop.xlane.xlu0 %37
  %v39 = vsel %vm35, %v18, 0.0
  %40 = vadd.xlane.f32.xlu0 %v39
  %v41 = vpop.xlane.xlu0 %40
  %v42 = vsel %vm35, %v19, 0.0
  %43 = vadd.xlane.f32.xlu0 %v42
  %v44 = vpop.xlane.xlu0 %43
  %v45 = vsel %vm35, %v20, 0.0
  %46 = vadd.xlane.f32.xlu0 %v45
  %v47 = vpop.xlane.xlu0 %46
  %v48 = vsel %vm35, %v21, 0.0
  %49 = vadd.xlane.f32.xlu0 %v48
  %v50 = vpop.xlane.xlu0 %49
  %v51 = vsel %vm35, %v22, 0.0
  %52 = vadd.xlane.f32.xlu0 %v51
  %v53 = vpop.xlane.xlu0 %52
  %v54 = vsel %vm35, %v23, 0.0
  %55 = vadd.xlane.f32.xlu0 %v54
  %v56 = vpop.xlane.xlu0 %55
  %v57 = vsel %vm35, %v24, 0.0
  %58 = vadd.xlane.f32.xlu0 %v57
  %v59 = vpop.xlane.xlu0 %58
  %v60 = vsel %vm35, %v25, 0.0
  %61 = vadd.xlane.f32.xlu0 %v60
  %v62 = vpop.xlane.xlu0 %61
  %v63 = vsel %vm35, %v26, 0.0
  %64 = vadd.xlane.f32.xlu0 %v63
  %v65 = vpop.xlane.xlu0 %64
  %v66 = vsel %vm35, %v27, 0.0
  %67 = vadd.xlane.f32.xlu0 %v66
  %v68 = vpop.xlane.xlu0 %67
  %v69 = vsel %vm35, %v28, 0.0
  %70 = vadd.xlane.f32.xlu0 %v69
  %v71 = vpop.xlane.xlu0 %70
  %v72 = vsel %vm35, %v29, 0.0
  %73 = vadd.xlane.f32.xlu0 %v72
  %v74 = vpop.xlane.xlu0 %73
  %v75 = vsel %vm35, %v30, 0.0
  %76 = vadd.xlane.f32.xlu0 %v75
  %v77 = vpop.xlane.xlu0 %76
  %v78 = vsel %vm35, %v31, 0.0
  %79 = vadd.xlane.f32.xlu0 %v78
  %v80 = vpop.xlane.xlu0 %79
  %v81 = vsel %vm35, %v32, 0.0
  %82 = vadd.xlane.f32.xlu0 %v81
  %v83 = vpop.xlane.xlu0 %82
  %v84 = vrcp.pop 16.0
  %v85 = vmul.f32 %v38, %v84
  %v86 = vmul.f32 %v41, %v84
  %v87 = vmul.f32 %v44, %v84
  %v88 = vmul.f32 %v47, %v84
  %v89 = vmul.f32 %v50, %v84
  %v90 = vmul.f32 %v53, %v84
  %v91 = vmul.f32 %v56, %v84
  %v92 = vmul.f32 %v59, %v84
  %v93 = vmul.f32 %v62, %v84
  %v94 = vmul.f32 %v65, %v84
  %v95 = vmul.f32 %v68, %v84
  %v96 = vmul.f32 %v71, %v84
  %v97 = vmul.f32 %v74, %v84
  %v98 = vmul.f32 %v77, %v84
  %v99 = vmul.f32 %v80, %v84
  %v100 = vmul.f32 %v83, %v84
  %v101 = vsub.f32 %v17, %v85
  %v102 = vsub.f32 %v18, %v86
  %v103 = vsub.f32 %v19, %v87
  %v104 = vsub.f32 %v20, %v88
  %v105 = vsub.f32 %v21, %v89
  %v106 = vsub.f32 %v22, %v90
  %v107 = vsub.f32 %v23, %v91
  %v108 = vsub.f32 %v24, %v92
  %v109 = vsub.f32 %v25, %v93
  %v110 = vsub.f32 %v26, %v94
  %v111 = vsub.f32 %v27, %v95
  %v112 = vsub.f32 %v28, %v96
  %v113 = vsub.f32 %v29, %v97
  %v114 = vsub.f32 %v30, %v98
  %v115 = vsub.f32 %v31, %v99
  %v116 = vsub.f32 %v32, %v100
  %v117 = vmul.f32 %v101, %v101
  %v118 = vmul.f32 %v102, %v102
  %v119 = vmul.f32 %v103, %v103
  %v120 = vmul.f32 %v104, %v104
  %v121 = vmul.f32 %v105, %v105
  %v122 = vmul.f32 %v106, %v106
  %v123 = vmul.f32 %v107, %v107
  %v124 = vmul.f32 %v108, %v108
  %v125 = vmul.f32 %v109, %v109
  %v126 = vmul.f32 %v110, %v110
  %v127 = vmul.f32 %v111, %v111
  %v128 = vmul.f32 %v112, %v112
  %v129 = vmul.f32 %v113, %v113
  %v130 = vmul.f32 %v114, %v114
  %v131 = vmul.f32 %v115, %v115
  %v132 = vmul.f32 %v116, %v116
  %v133 = vsel %vm35, %v117, 0.0
  %134 = vadd.xlane.f32.xlu0 %v133
  %v135 = vpop.xlane.xlu0 %134
  %v136 = vsel %vm35, %v118, 0.0
  %137 = vadd.xlane.f32.xlu0 %v136
  %v138 = vpop.xlane.xlu0 %137
  %v139 = vsel %vm35, %v119, 0.0
  %140 = vadd.xlane.f32.xlu0 %v139
  %v141 = vpop.xlane.xlu0 %140
  %v142 = vsel %vm35, %v120, 0.0
  %143 = vadd.xlane.f32.xlu0 %v142
  %v144 = vpop.xlane.xlu0 %143
  %v145 = vsel %vm35, %v121, 0.0
  %146 = vadd.xlane.f32.xlu0 %v145
  %v147 = vpop.xlane.xlu0 %146
  %v148 = vsel %vm35, %v122, 0.0
  %149 = vadd.xlane.f32.xlu0 %v148
  %v150 = vpop.xlane.xlu0 %149
  %v151 = vsel %vm35, %v123, 0.0
  %152 = vadd.xlane.f32.xlu0 %v151
  %v153 = vpop.xlane.xlu0 %152
  %v154 = vsel %vm35, %v124, 0.0
  %155 = vadd.xlane.f32.xlu0 %v154
  %v156 = vpop.xlane.xlu0 %155
  %v157 = vsel %vm35, %v125, 0.0
  %158 = vadd.xlane.f32.xlu0 %v157
  %v159 = vpop.xlane.xlu0 %158
  %v160 = vsel %vm35, %v126, 0.0
  %161 = vadd.xlane.f32.xlu0 %v160
  %v162 = vpop.xlane.xlu0 %161
  %v163 = vsel %vm35, %v127, 0.0
  %164 = vadd.xlane.f32.xlu0 %v163
  %v165 = vpop.xlane.xlu0 %164
  %v166 = vsel %vm35, %v128, 0.0
  %167 = vadd.xlane.f32.xlu0 %v166
  %v168 = vpop.xlane.xlu0 %167
  %v169 = vsel %vm35, %v129, 0.0
  %170 = vadd.xlane.f32.xlu0 %v169
  %v171 = vpop.xlane.xlu0 %170
  %v172 = vsel %vm35, %v130, 0.0
  %173 = vadd.xlane.f32.xlu0 %v172
  %v174 = vpop.xlane.xlu0 %173
  %v175 = vsel %vm35, %v131, 0.0
  %176 = vadd.xlane.f32.xlu0 %v175
  %v177 = vpop.xlane.xlu0 %176
  %v178 = vsel %vm35, %v132, 0.0
  %179 = vadd.xlane.f32.xlu0 %v178
  %v180 = vpop.xlane.xlu0 %179
  %v181 = vmul.f32 %v135, %v84
  %v182 = vmul.f32 %v138, %v84
  %v183 = vmul.f32 %v141, %v84
  %v184 = vmul.f32 %v144, %v84
  %v185 = vmul.f32 %v147, %v84
  %v186 = vmul.f32 %v150, %v84
  %v187 = vmul.f32 %v153, %v84
  %v188 = vmul.f32 %v156, %v84
  %v189 = vmul.f32 %v159, %v84
  %v190 = vmul.f32 %v162, %v84
  %v191 = vmul.f32 %v165, %v84
  %v192 = vmul.f32 %v168, %v84
  %v193 = vmul.f32 %v171, %v84
  %v194 = vmul.f32 %v174, %v84
  %v195 = vmul.f32 %v177, %v84
  %v196 = vmul.f32 %v180, %v84
  %v197 = vadd.f32 %v181, 1e-05
  %v198 = vadd.f32 %v182, 1e-05
  %v199 = vadd.f32 %v183, 1e-05
  %v200 = vadd.f32 %v184, 1e-05
  %v201 = vadd.f32 %v185, 1e-05
  %v202 = vadd.f32 %v186, 1e-05
  %v203 = vadd.f32 %v187, 1e-05
  %v204 = vadd.f32 %v188, 1e-05
  %v205 = vadd.f32 %v189, 1e-05
  %v206 = vadd.f32 %v190, 1e-05
  %v207 = vadd.f32 %v191, 1e-05
  %v208 = vadd.f32 %v192, 1e-05
  %v209 = vadd.f32 %v193, 1e-05
  %v210 = vadd.f32 %v194, 1e-05
  %v211 = vadd.f32 %v195, 1e-05
  %v212 = vadd.f32 %v196, 1e-05
  %v213 = vrsqrt.pop %v197
  %v214 = vrsqrt.pop %v198
  %v215 = vrsqrt.pop %v199
  %v216 = vrsqrt.pop %v200
  %v217 = vrsqrt.pop %v201
  %v218 = vrsqrt.pop %v202
  %v219 = vrsqrt.pop %v203
  %v220 = vrsqrt.pop %v204
  %v221 = vrsqrt.pop %v205
  %v222 = vrsqrt.pop %v206
  %v223 = vrsqrt.pop %v207
  %v224 = vrsqrt.pop %v208
  %v225 = vrsqrt.pop %v209
  %v226 = vrsqrt.pop %v210
  %v227 = vrsqrt.pop %v211
  %v228 = vrsqrt.pop %v212
  %v229 = vmul.f32 %v101, %v213
  %v230 = vmul.f32 %v102, %v214
  %v231 = vmul.f32 %v103, %v215
  %v232 = vmul.f32 %v104, %v216
  %v233 = vmul.f32 %v105, %v217
  %v234 = vmul.f32 %v106, %v218
  %v235 = vmul.f32 %v107, %v219
  %v236 = vmul.f32 %v108, %v220
  %v237 = vmul.f32 %v109, %v221
  %v238 = vmul.f32 %v110, %v222
  %v239 = vmul.f32 %v111, %v223
  %v240 = vmul.f32 %v112, %v224
  %v241 = vmul.f32 %v113, %v225
  %v242 = vmul.f32 %v114, %v226
  %v243 = vmul.f32 %v115, %v227
  %v244 = vmul.f32 %v116, %v228
  %v246 = vlaneseq
  %v247 = vshrl.u32 %v246, 7
  %v248 = vsub.s32 0, %v247
  %v249 = vrot.slane %v33, %v248
  %v251 = vmul.f32 %v229, %v249
  %v252 = vmul.f32 %v230, %v249
  %v253 = vmul.f32 %v231, %v249
  %v254 = vmul.f32 %v232, %v249
  %v255 = vmul.f32 %v233, %v249
  %v256 = vmul.f32 %v234, %v249
  %v257 = vmul.f32 %v235, %v249
  %v258 = vmul.f32 %v236, %v249
  %v259 = vmul.f32 %v237, %v249
  %v260 = vmul.f32 %v238, %v249
  %v261 = vmul.f32 %v239, %v249
  %v262 = vmul.f32 %v240, %v249
  %v263 = vmul.f32 %v241, %v249
  %v264 = vmul.f32 %v242, %v249
  %v265 = vmul.f32 %v243, %v249
  %v266 = vmul.f32 %v244, %v249
  %v268 = vlaneseq
  %v269 = vshrl.u32 %v268, 7
  %v270 = vsub.s32 0, %v269
  %v271 = vrot.slane %v34, %v270
  %v273 = vadd.f32 %v251, %v271
  %v274 = vadd.f32 %v252, %v271
  %v275 = vadd.f32 %v253, %v271
  %v276 = vadd.f32 %v254, %v271
  %v277 = vadd.f32 %v255, %v271
  %v278 = vadd.f32 %v256, %v271
  %v279 = vadd.f32 %v257, %v271
  %v280 = vadd.f32 %v258, %v271
  %v281 = vadd.f32 %v259, %v271
  %v282 = vadd.f32 %v260, %v271
  %v283 = vadd.f32 %v261, %v271
  %v284 = vadd.f32 %v262, %v271
  %v285 = vadd.f32 %v263, %v271
  %v286 = vadd.f32 %v264, %v271
  %v287 = vadd.f32 %v265, %v271
  %v288 = vadd.f32 %v266, %v271
  %v289 = vld [vmem:[%s3] sm:$0xff]
  %v290 = vld [vmem:[%s3 + $0x8] sm:$0xff]
  %v292 = vsel %vm35, %v273, 0
  %v295 = vsel %vm35, %v274, 0
  %v298 = vsel %vm35, %v275, 0
  %v301 = vsel %vm35, %v276, 0
  %v304 = vsel %vm35, %v277, 0
  %v307 = vsel %vm35, %v278, 0
  %v310 = vsel %vm35, %v279, 0
  %v313 = vsel %vm35, %v280, 0
  %v316 = vsel %vm35, %v281, 0
  %v319 = vsel %vm35, %v282, 0
  %v322 = vsel %vm35, %v283, 0
  %v325 = vsel %vm35, %v284, 0
  %v328 = vsel %vm35, %v285, 0
  %v331 = vsel %vm35, %v286, 0
  %v334 = vsel %vm35, %v287, 0
  %v337 = vsel %vm35, %v288, 0
  %339 = vmatprep.subr.mxu0 0.0
  %340 = vmatpush1.msra.mxu0 %v289
  %341 = vmatprep.subr.mxu0 0.0
  %342 = vmatpush1.msra.mxu0 %v290
  %343 = vmatprep.subr.mxu0 0.0
  %344 = vmatpush1.msra.mxu0 0.0
  %345 = vmatprep.subr.mxu0 0.0
  %346 = vmatpush1.msra.mxu0 0.0
  %347 = vmatprep.subr.mxu0 0.0
  %348 = vmatpush1.msra.mxu0 0.0
  %349 = vmatprep.subr.mxu0 0.0
  %350 = vmatpush1.msra.mxu0 0.0
  %351 = vmatprep.subr.mxu0 0.0
  %352 = vmatpush1.msra.mxu0 0.0
  %353 = vmatprep.subr.mxu0 0.0
  %354 = vmatpush1.msra.mxu0 0.0
  %355 = vmatprep.subr.mxu0 0.0
  %356 = vmatpush1.msra.mxu0 0.0
  %357 = vmatprep.subr.mxu0 0.0
  %358 = vmatpush1.msra.mxu0 0.0
  %359 = vmatprep.subr.mxu0 0.0
  %360 = vmatpush1.msra.mxu0 0.0
  %361 = vmatprep.subr.mxu0 0.0
  %362 = vmatpush1.msra.mxu0 0.0
  %363 = vmatprep.subr.mxu0 0.0
  %364 = vmatpush1.msra.mxu0 0.0
  %365 = vmatprep.subr.mxu0 0.0
  %366 = vmatpush1.msra.mxu0 0.0
  %367 = vmatprep.subr.mxu0 0.0
  %368 = vmatpush1.msra.mxu0 0.0
  %369 = vmatprep.subr.mxu0 0.0
  %370 = vmatpush1.msra.mxu0 0.0
  %371 = vmatprep.subr.mxu0 0.0
  %372 = vmatpush1.msra.mxu0 0.0
  %373 = vmatprep.subr.mxu0 0.0
  %374 = vmatpush1.msra.mxu0 0.0
  %375 = vmatprep.subr.mxu0 0.0
  %376 = vmatpush1.msra.mxu0 0.0
  %377 = vmatprep.subr.mxu0 0.0
  %378 = vmatpush1.msra.mxu0 0.0
  %379 = vmatprep.subr.mxu0 0.0
  %380 = vmatpush1.msra.mxu0 0.0
  %381 = vmatprep.subr.mxu0 0.0
  %382 = vmatpush1.msra.mxu0 0.0
  %383 = vmatprep.subr.mxu0 0.0
  %384 = vmatpush1.msra.mxu0 0.0
  %385 = vmatprep.subr.mxu0 0.0
  %386 = vmatpush1.msra.mxu0 0.0
  %387 = vmatprep.subr.mxu0 0.0
  %388 = vmatpush1.msra.mxu0 0.0
  %389 = vmatprep.subr.mxu0 0.0
  %390 = vmatpush1.msra.mxu0 0.0
  %391 = vmatprep.subr.mxu0 0.0
  %392 = vmatpush1.msra.mxu0 0.0
  %393 = vmatprep.subr.mxu0 0.0
  %394 = vmatpush1.msra.mxu0 0.0
  %395 = vmatprep.subr.mxu0 0.0
  %396 = vmatpush1.msra.mxu0 0.0
  %397 = vmatprep.subr.mxu0 0.0
  %398 = vmatpush1.msra.mxu0 0.0
  %399 = vmatprep.subr.mxu0 0.0
  %400 = vmatpush1.msra.mxu0 0.0
  %401 = vmatprep.subr.mxu0 0.0
  %402 = vmatpush1.msra.mxu0 0.0
  %403 = vmatprep.mubr.f32.mxu0 0.0
  %404 = vmatmul.mubr.f32.gmra.mrb[0].mxu0 %v292
  %v405 = vpop.f32.mrb[0].mxu0
  %v406 = vadd.f32 0.0, %v405
  %v407 = vpop.f32.mrb[0].mxu0
  %408 = vmatprep.mubr.f32.mxu0 0.0
  %409 = vmatmul.mubr.f32.gmra.mrb[0].mxu0 %v295
  %v410 = vpop.f32.mrb[0].mxu0
  %v411 = vadd.f32 0.0, %v410
  %v412 = vpop.f32.mrb[0].mxu0
  %413 = vmatprep.mubr.f32.mxu0 0.0
  %414 = vmatmul.mubr.f32.gmra.mrb[0].mxu0 %v298
  %v415 = vpop.f32.mrb[0].mxu0
  %v416 = vadd.f32 0.0, %v415
  %v417 = vpop.f32.mrb[0].mxu0
  %418 = vmatprep.mubr.f32.mxu0 0.0
  %419 = vmatmul.mubr.f32.gmra.mrb[0].mxu0 %v301
  %v420 = vpop.f32.mrb[0].mxu0
  %v421 = vadd.f32 0.0, %v420
  %v422 = vpop.f32.mrb[0].mxu0
  %423 = vmatprep.mubr.f32.mxu0 0.0
  %424 = vmatmul.mubr.f32.gmra.mrb[0].mxu0 %v304
  %v425 = vpop.f32.mrb[0].mxu0
  %v426 = vadd.f32 0.0, %v425
  %v427 = vpop.f32.mrb[0].mxu0
  %428 = vmatprep.mubr.f32.mxu0 0.0
  %429 = vmatmul.mubr.f32.gmra.mrb[0].mxu0 %v307
  %v430 = vpop.f32.mrb[0].mxu0
  %v431 = vadd.f32 0.0, %v430
  %v432 = vpop.f32.mrb[0].mxu0
  %433 = vmatprep.mubr.f32.mxu0 0.0
  %434 = vmatmul.mubr.f32.gmra.mrb[0].mxu0 %v310
  %v435 = vpop.f32.mrb[0].mxu0
  %v436 = vadd.f32 0.0, %v435
  %v437 = vpop.f32.mrb[0].mxu0
  %438 = vmatprep.mubr.f32.mxu0 0.0
  %439 = vmatmul.mubr.f32.gmra.mrb[0].mxu0 %v313
  %v440 = vpop.f32.mrb[0].mxu0
  %v441 = vadd.f32 0.0, %v440
  %v442 = vpop.f32.mrb[0].mxu0
  %443 = vmatprep.mubr.f32.mxu0 0.0
  %444 = vmatmul.mubr.f32.gmra.mrb[0].mxu0 %v316
  %v445 = vpop.f32.mrb[0].mxu0
  %v446 = vadd.f32 0.0, %v445
  %v447 = vpop.f32.mrb[0].mxu0
  %448 = vmatprep.mubr.f32.mxu0 0.0
  %449 = vmatmul.mubr.f32.gmra.mrb[0].mxu0 %v319
  %v450 = vpop.f32.mrb[0].mxu0
  %v451 = vadd.f32 0.0, %v450
  %v452 = vpop.f32.mrb[0].mxu0
  %453 = vmatprep.mubr.f32.mxu0 0.0
  %454 = vmatmul.mubr.f32.gmra.mrb[0].mxu0 %v322
  %v455 = vpop.f32.mrb[0].mxu0
  %v456 = vadd.f32 0.0, %v455
  %v457 = vpop.f32.mrb[0].mxu0
  %458 = vmatprep.mubr.f32.mxu0 0.0
  %459 = vmatmul.mubr.f32.gmra.mrb[0].mxu0 %v325
  %v460 = vpop.f32.mrb[0].mxu0
  %v461 = vadd.f32 0.0, %v460
  %v462 = vpop.f32.mrb[0].mxu0
  %463 = vmatprep.mubr.f32.mxu0 0.0
  %464 = vmatmul.mubr.f32.gmra.mrb[0].mxu0 %v328
  %v465 = vpop.f32.mrb[0].mxu0
  %v466 = vadd.f32 0.0, %v465
  %v467 = vpop.f32.mrb[0].mxu0
  %468 = vmatprep.mubr.f32.mxu0 0.0
  %469 = vmatmul.mubr.f32.gmra.mrb[0].mxu0 %v331
  %v470 = vpop.f32.mrb[0].mxu0
  %v471 = vadd.f32 0.0, %v470
  %v472 = vpop.f32.mrb[0].mxu0
  %473 = vmatprep.mubr.f32.mxu0 0.0
  %474 = vmatmul.mubr.f32.gmra.mrb[0].mxu0 %v334
  %v475 = vpop.f32.mrb[0].mxu0
  %v476 = vadd.f32 0.0, %v475
  %v477 = vpop.f32.mrb[0].mxu0
  %478 = vmatprep.mubr.f32.mxu0 0.0
  %479 = vmatmul.mubr.f32.gmra.mrb[0].mxu0 %v337
  %v480 = vpop.f32.mrb[0].mxu0
  %v481 = vadd.f32 0.0, %v480
  %v482 = vpop.f32.mrb[0].mxu0
  %483 = vdwg.mxu0
  %484 = vst [vmem:[%s4] sm:$0xff] %v406
  %485 = vst [vmem:[%s4 + $0x8] sm:$0xff] %v411
  %486 = vst [vmem:[%s4 + $0x10] sm:$0xff] %v416
  %487 = vst [vmem:[%s4 + $0x18] sm:$0xff] %v421
  %488 = vst [vmem:[%s4 + $0x20] sm:$0xff] %v426
  %489 = vst [vmem:[%s4 + $0x28] sm:$0xff] %v431
  %490 = vst [vmem:[%s4 + $0x30] sm:$0xff] %v436
  %491 = vst [vmem:[%s4 + $0x38] sm:$0xff] %v441
  %492 = vst [vmem:[%s4 + $0x40] sm:$0xff] %v446
  %493 = vst [vmem:[%s4 + $0x48] sm:$0xff] %v451
  %494 = vst [vmem:[%s4 + $0x50] sm:$0xff] %v456
  %495 = vst [vmem:[%s4 + $0x58] sm:$0xff] %v461
  %496 = vst [vmem:[%s4 + $0x60] sm:$0xff] %v466
  %497 = vst [vmem:[%s4 + $0x68] sm:$0xff] %v471
  %498 = vst [vmem:[%s4 + $0x70] sm:$0xff] %v476
  %499 = vst [vmem:[%s4 + $0x78] sm:$0xff] %v481
  // Predicated region
  $region18: #{gno_forward.3} parent=0 // pred_check
    _
  $region19: #{gno_forward.3} parent=0 // pred_check_branch
    %501 = sbr.rel (0) target = $region21
  $region20: #{gno_forward.3} parent=0 // pred_region
    _
  $region21: #{gno_forward.3} parent=0 // pred_fallthru
    _
  // Predicated region
  $region22: #{gno_forward.3} parent=0 // pred_check
    _
  $region23: #{gno_forward.3} parent=0 // pred_check_branch
    %503 = sbr.rel (0) target = $region25
  $region24: #{gno_forward.3} parent=0 // pred_region
    _
  $region25: #{gno_forward.3} parent=0 // pred_fallthru
    _

// kernel: gno_forward.4
$region0: #{gno_forward.4}
  #allocation0 [shape = 'u32[]', space=smem, size = 0x4, offset = 0x4, fixed_abs, tag = 'smem constant byte address 0x4 - core index']
  #allocation1 [shape = 'u32[144,128]{1,0:T(1,128)}', space=vmem, size = 0x12000, scoped, tag = 'internal scratch']
  #allocation2 [shape = 'f32[128,128]{1,0:T(8,128)}', space=vmem, size = 0x10000, scoped, tag = 'scratch operand']
  %s0 = inlined_call_operand.vmem [shape: bf16[128,128], index: 0, kind: input, shape index: {}]
  %s1 = inlined_call_operand.vmem [shape: f32[128,128], index: 1, kind: input, shape index: {}]
  %s2 = inlined_call_operand.vmem [shape: f32[1,128], index: 2, kind: input, shape index: {}]
  %s3 = inlined_call_operand.vmem [shape: f32[1,128], index: 3, kind: input, shape index: {}]
  %s4 = inlined_call_operand.vmem [shape: f32[1,128], index: 4, kind: input, shape index: {}]
  %s5 = inlined_call_operand.vmem [shape: f32[128,128], index: 5, kind: input, shape index: {}]
  %s6 = inlined_call_operand.vmem [shape: f32[128,128], index: 6, kind: output, shape index: {}]
  %s7 = sld [smem:[#allocation0]]
  $region42: #{gno_forward.4} parent=0
    _
  %s9 = ssub.s32 1, %s7
  %s10 = scalar_select 0, %s9, %s7
  // Predicated region
  $region2: #{gno_forward.4} parent=0 // pred_check
    _
  $region3: #{gno_forward.4} parent=0 // pred_check_branch
    %12 = sbr.rel (0) target = $region5
  $region4: #{gno_forward.4} parent=0 // pred_region
    _
  $region5: #{gno_forward.4} parent=0 // pred_fallthru
    _
  // Predicated region
  $region6: #{gno_forward.4} parent=0 // pred_check
    _
  $region7: #{gno_forward.4} parent=0 // pred_check_branch
    %14 = sbr.rel (0) target = $region9
  $region8: #{gno_forward.4} parent=0 // pred_region
    _
  $region9: #{gno_forward.4} parent=0 // pred_fallthru
    _
  // Predicated region
  $region10: #{gno_forward.4} parent=0 // pred_check
    _
  $region11: #{gno_forward.4} parent=0 // pred_check_branch
    %16 = sbr.rel (0) target = $region13
  $region12: #{gno_forward.4} parent=0 // pred_region
    _
  $region13: #{gno_forward.4} parent=0 // pred_fallthru
    _
  // Predicated region
  $region14: #{gno_forward.4} parent=0 // pred_check
    _
  $region15: #{gno_forward.4} parent=0 // pred_check_branch
    %18 = sbr.rel (0) target = $region17
  $region16: #{gno_forward.4} parent=0 // pred_region
    _
  $region17: #{gno_forward.4} parent=0 // pred_fallthru
    _
  // Predicated region
  $region18: #{gno_forward.4} parent=0 // pred_check
    _
  $region19: #{gno_forward.4} parent=0 // pred_check_branch
    %20 = sbr.rel (0) target = $region21
  $region20: #{gno_forward.4} parent=0 // pred_region
    _
  $region21: #{gno_forward.4} parent=0 // pred_fallthru
    _
  // Predicated region
  $region22: #{gno_forward.4} parent=0 // pred_check
    _
  $region23: #{gno_forward.4} parent=0 // pred_check_branch
    %22 = sbr.rel (0) target = $region25
  $region24: #{gno_forward.4} parent=0 // pred_region
    _
  $region25: #{gno_forward.4} parent=0 // pred_fallthru
    _
  %p23 = scmp.eq.s32.totalorder 0, 0
  // Predicated region
  $region26: #{gno_forward.4} parent=0 // pred_check
    %p24 = pneg %p23
  $region27: #{gno_forward.4} parent=0 // pred_check_branch
    %26 = sbr.rel (%p24) target = $region29
  $region28: #{gno_forward.4} parent=0 // pred_region
    %27 = vst [vmem:[#allocation2] sm:$0xff] 0.0
    %28 = vst [vmem:[#allocation2 + $0x8] sm:$0xff] 0.0
    %29 = vst [vmem:[#allocation2 + $0x10] sm:$0xff] 0.0
    %30 = vst [vmem:[#allocation2 + $0x18] sm:$0xff] 0.0
    %31 = vst [vmem:[#allocation2 + $0x20] sm:$0xff] 0.0
    %32 = vst [vmem:[#allocation2 + $0x28] sm:$0xff] 0.0
    %33 = vst [vmem:[#allocation2 + $0x30] sm:$0xff] 0.0
    %34 = vst [vmem:[#allocation2 + $0x38] sm:$0xff] 0.0
    %35 = vst [vmem:[#allocation2 + $0x40] sm:$0xff] 0.0
    %36 = vst [vmem:[#allocation2 + $0x48] sm:$0xff] 0.0
    %37 = vst [vmem:[#allocation2 + $0x50] sm:$0xff] 0.0
    %38 = vst [vmem:[#allocation2 + $0x58] sm:$0xff] 0.0
    %39 = vst [vmem:[#allocation2 + $0x60] sm:$0xff] 0.0
    %40 = vst [vmem:[#allocation2 + $0x68] sm:$0xff] 0.0
    %41 = vst [vmem:[#allocation2 + $0x70] sm:$0xff] 0.0
    %42 = vst [vmem:[#allocation2 + $0x78] sm:$0xff] 0.0
  $region29: #{gno_forward.4} parent=0 // pred_fallthru
    _
  %s43 = smul.u32 0, 128
  %s44 = scalar_lea.vmem %s1, %s43
  %v45 = vld [vmem:[%s44] sm:$0xff]
  %v46 = vld [vmem:[%s44 + $0x8] sm:$0xff]
  %v47 = vld [vmem:[%s44 + $0x10] sm:$0xff]
  %v48 = vld [vmem:[%s44 + $0x18] sm:$0xff]
  %v49 = vld [vmem:[%s44 + $0x20] sm:$0xff]
  %v50 = vld [vmem:[%s44 + $0x28] sm:$0xff]
  %v51 = vld [vmem:[%s44 + $0x30] sm:$0xff]
  %v52 = vld [vmem:[%s44 + $0x38] sm:$0xff]
  %v53 = vld [vmem:[%s44 + $0x40] sm:$0xff]
  %v54 = vld [vmem:[%s44 + $0x48] sm:$0xff]
  %v55 = vld [vmem:[%s44 + $0x50] sm:$0xff]
  %v56 = vld [vmem:[%s44 + $0x58] sm:$0xff]
  %v57 = vld [vmem:[%s44 + $0x60] sm:$0xff]
  %v58 = vld [vmem:[%s44 + $0x68] sm:$0xff]
  %v59 = vld [vmem:[%s44 + $0x70] sm:$0xff]
  %v60 = vld [vmem:[%s44 + $0x78] sm:$0xff]
  %v61 = vld [vmem:[#allocation2] sm:$0xff]
  %v62 = vld [vmem:[#allocation2 + $0x8] sm:$0xff]
  %v63 = vld [vmem:[#allocation2 + $0x10] sm:$0xff]
  %v64 = vld [vmem:[#allocation2 + $0x18] sm:$0xff]
  %v65 = vld [vmem:[#allocation2 + $0x20] sm:$0xff]
  %v66 = vld [vmem:[#allocation2 + $0x28] sm:$0xff]
  %v67 = vld [vmem:[#allocation2 + $0x30] sm:$0xff]
  %v68 = vld [vmem:[#allocation2 + $0x38] sm:$0xff]
  %v69 = vld [vmem:[#allocation2 + $0x40] sm:$0xff]
  %v70 = vld [vmem:[#allocation2 + $0x48] sm:$0xff]
  %v71 = vld [vmem:[#allocation2 + $0x50] sm:$0xff]
  %v72 = vld [vmem:[#allocation2 + $0x58] sm:$0xff]
  %v73 = vld [vmem:[#allocation2 + $0x60] sm:$0xff]
  %v74 = vld [vmem:[#allocation2 + $0x68] sm:$0xff]
  %v75 = vld [vmem:[#allocation2 + $0x70] sm:$0xff]
  %v76 = vld [vmem:[#allocation2 + $0x78] sm:$0xff]
  %v77 = vld [vmem:[%s0] sm:$0xf]
  %v78 = vld [vmem:[%s0 + $0x4] sm:$0xf]
  %v79 = vld [vmem:[%s0 + $0x8] sm:$0xf]
  %v80 = vld [vmem:[%s0 + $0xc] sm:$0xf]
  %v81 = vld [vmem:[%s0 + $0x10] sm:$0xf]
  %v82 = vld [vmem:[%s0 + $0x14] sm:$0xf]
  %v83 = vld [vmem:[%s0 + $0x18] sm:$0xf]
  %v84 = vld [vmem:[%s0 + $0x1c] sm:$0xf]
  %v85 = vld [vmem:[%s0 + $0x20] sm:$0xf]
  %v86 = vld [vmem:[%s0 + $0x24] sm:$0xf]
  %v87 = vld [vmem:[%s0 + $0x28] sm:$0xf]
  %v88 = vld [vmem:[%s0 + $0x2c] sm:$0xf]
  %v89 = vld [vmem:[%s0 + $0x30] sm:$0xf]
  %v90 = vld [vmem:[%s0 + $0x34] sm:$0xf]
  %v91 = vld [vmem:[%s0 + $0x38] sm:$0xf]
  %v92 = vld [vmem:[%s0 + $0x3c] sm:$0xf]
  %v93 = vunpack.c.l.bf16 %v77
  %v94 = vunpack.c.l.bf16 %v78
  %v95 = vunpack.c.l.bf16 %v79
  %v96 = vunpack.c.l.bf16 %v80
  %v97 = vunpack.c.l.bf16 %v81
  %v98 = vunpack.c.l.bf16 %v82
  %v99 = vunpack.c.l.bf16 %v83
  %v100 = vunpack.c.l.bf16 %v84
  %v101 = vunpack.c.l.bf16 %v85
  %v102 = vunpack.c.l.bf16 %v86
  %v103 = vunpack.c.l.bf16 %v87
  %v104 = vunpack.c.l.bf16 %v88
  %v105 = vunpack.c.l.bf16 %v89
  %v106 = vunpack.c.l.bf16 %v90
  %v107 = vunpack.c.l.bf16 %v91
  %v108 = vunpack.c.l.bf16 %v92
  %109 = vmatprep.subr.mxu0 0.0
  %110 = vmatpush1.msra.mxu0 %v45
  %111 = vmatprep.subr.mxu0 0.0
  %112 = vmatpush1.msra.mxu0 %v46
  %113 = vmatprep.subr.mxu0 0.0
  %114 = vmatpush1.msra.mxu0 %v47
  %115 = vmatprep.subr.mxu0 0.0
  %116 = vmatpush1.msra.mxu0 %v48
  %117 = vmatprep.subr.mxu0 0.0
  %118 = vmatpush1.msra.mxu0 %v49
  %119 = vmatprep.subr.mxu0 0.0
  %120 = vmatpush1.msra.mxu0 %v50
  %121 = vmatprep.subr.mxu0 0.0
  %122 = vmatpush1.msra.mxu0 %v51
  %123 = vmatprep.subr.mxu0 0.0
  %124 = vmatpush1.msra.mxu0 %v52
  %125 = vmatprep.subr.mxu0 0.0
  %126 = vmatpush1.msra.mxu0 %v53
  %127 = vmatprep.subr.mxu0 0.0
  %128 = vmatpush1.msra.mxu0 %v54
  %129 = vmatprep.subr.mxu0 0.0
  %130 = vmatpush1.msra.mxu0 %v55
  %131 = vmatprep.subr.mxu0 0.0
  %132 = vmatpush1.msra.mxu0 %v56
  %133 = vmatprep.subr.mxu0 0.0
  %134 = vmatpush1.msra.mxu0 %v57
  %135 = vmatprep.subr.mxu0 0.0
  %136 = vmatpush1.msra.mxu0 %v58
  %137 = vmatprep.subr.mxu0 0.0
  %138 = vmatpush1.msra.mxu0 %v59
  %139 = vmatprep.subr.mxu0 0.0
  %140 = vmatpush1.msra.mxu0 %v60
  %141 = vmatprep.subr.mxu0 0.0
  %142 = vmatpush1.msra.mxu0 0.0
  %143 = vmatprep.subr.mxu0 0.0
  %144 = vmatpush1.msra.mxu0 0.0
  %145 = vmatprep.subr.mxu0 0.0
  %146 = vmatpush1.msra.mxu0 0.0
  %147 = vmatprep.subr.mxu0 0.0
  %148 = vmatpush1.msra.mxu0 0.0
  %149 = vmatprep.subr.mxu0 0.0
  %150 = vmatpush1.msra.mxu0 0.0
  %151 = vmatprep.subr.mxu0 0.0
  %152 = vmatpush1.msra.mxu0 0.0
  %153 = vmatprep.subr.mxu0 0.0
  %154 = vmatpush1.msra.mxu0 0.0
  %155 = vmatprep.subr.mxu0 0.0
  %156 = vmatpush1.msra.mxu0 0.0
  %157 = vmatprep.subr.mxu0 0.0
  %158 = vmatpush1.msra.mxu0 0.0
  %159 = vmatprep.subr.mxu0 0.0
  %160 = vmatpush1.msra.mxu0 0.0
  %161 = vmatprep.subr.mxu0 0.0
  %162 = vmatpush1.msra.mxu0 0.0
  %163 = vmatprep.subr.mxu0 0.0
  %164 = vmatpush1.msra.mxu0 0.0
  %165 = vmatprep.subr.mxu0 0.0
  %166 = vmatpush1.msra.mxu0 0.0
  %167 = vmatprep.subr.mxu0 0.0
  %168 = vmatpush1.msra.mxu0 0.0
  %169 = vmatprep.subr.mxu0 0.0
  %170 = vmatpush1.msra.mxu0 0.0
  %171 = vmatprep.subr.mxu0 0.0
  %172 = vmatpush1.msra.mxu0 0.0
  %173 = vmatprep.mubr.f32.mxu0 0.0
  %174 = vmatmul.mubr.f32.gmra.mrb[0].mxu0 %v93
  %v175 = vpop.f32.mrb[0].mxu0
  %v176 = vadd.f32 0.0, %v175
  %v177 = vpop.f32.mrb[0].mxu0
  %178 = vmatprep.mubr.f32.mxu0 0.0
  %179 = vmatmul.mubr.f32.gmra.mrb[0].mxu0 %v94
  %v180 = vpop.f32.mrb[0].mxu0
  %v181 = vadd.f32 0.0, %v180
  %v182 = vpop.f32.mrb[0].mxu0
  %183 = vmatprep.mubr.f32.mxu0 0.0
  %184 = vmatmul.mubr.f32.gmra.mrb[0].mxu0 %v95
  %v185 = vpop.f32.mrb[0].mxu0
  %v186 = vadd.f32 0.0, %v185
  %v187 = vpop.f32.mrb[0].mxu0
  %188 = vmatprep.mubr.f32.mxu0 0.0
  %189 = vmatmul.mubr.f32.gmra.mrb[0].mxu0 %v96
  %v190 = vpop.f32.mrb[0].mxu0
  %v191 = vadd.f32 0.0, %v190
  %v192 = vpop.f32.mrb[0].mxu0
  %193 = vmatprep.mubr.f32.mxu0 0.0
  %194 = vmatmul.mubr.f32.gmra.mrb[0].mxu0 %v97
  %v195 = vpop.f32.mrb[0].mxu0
  %v196 = vadd.f32 0.0, %v195
  %v197 = vpop.f32.mrb[0].mxu0
  %198 = vmatprep.mubr.f32.mxu0 0.0
  %199 = vmatmul.mubr.f32.gmra.mrb[0].mxu0 %v98
  %v200 = vpop.f32.mrb[0].mxu0
  %v201 = vadd.f32 0.0, %v200
  %v202 = vpop.f32.mrb[0].mxu0
  %203 = vmatprep.mubr.f32.mxu0 0.0
  %204 = vmatmul.mubr.f32.gmra.mrb[0].mxu0 %v99
  %v205 = vpop.f32.mrb[0].mxu0
  %v206 = vadd.f32 0.0, %v205
  %v207 = vpop.f32.mrb[0].mxu0
  %208 = vmatprep.mubr.f32.mxu0 0.0
  %209 = vmatmul.mubr.f32.gmra.mrb[0].mxu0 %v100
  %v210 = vpop.f32.mrb[0].mxu0
  %v211 = vadd.f32 0.0, %v210
  %v212 = vpop.f32.mrb[0].mxu0
  %213 = vmatprep.mubr.f32.mxu0 0.0
  %214 = vmatmul.mubr.f32.gmra.mrb[0].mxu0 %v101
  %v215 = vpop.f32.mrb[0].mxu0
  %v216 = vadd.f32 0.0, %v215
  %v217 = vpop.f32.mrb[0].mxu0
  %218 = vmatprep.mubr.f32.mxu0 0.0
  %219 = vmatmul.mubr.f32.gmra.mrb[0].mxu0 %v102
  %v220 = vpop.f32.mrb[0].mxu0
  %v221 = vadd.f32 0.0, %v220
  %v222 = vpop.f32.mrb[0].mxu0
  %223 = vmatprep.mubr.f32.mxu0 0.0
  %224 = vmatmul.mubr.f32.gmra.mrb[0].mxu0 %v103
  %v225 = vpop.f32.mrb[0].mxu0
  %v226 = vadd.f32 0.0, %v225
  %v227 = vpop.f32.mrb[0].mxu0
  %228 = vmatprep.mubr.f32.mxu0 0.0
  %229 = vmatmul.mubr.f32.gmra.mrb[0].mxu0 %v104
  %v230 = vpop.f32.mrb[0].mxu0
  %v231 = vadd.f32 0.0, %v230
  %v232 = vpop.f32.mrb[0].mxu0
  %233 = vmatprep.mubr.f32.mxu0 0.0
  %234 = vmatmul.mubr.f32.gmra.mrb[0].mxu0 %v105
  %v235 = vpop.f32.mrb[0].mxu0
  %v236 = vadd.f32 0.0, %v235
  %v237 = vpop.f32.mrb[0].mxu0
  %238 = vmatprep.mubr.f32.mxu0 0.0
  %239 = vmatmul.mubr.f32.gmra.mrb[0].mxu0 %v106
  %v240 = vpop.f32.mrb[0].mxu0
  %v241 = vadd.f32 0.0, %v240
  %v242 = vpop.f32.mrb[0].mxu0
  %243 = vmatprep.mubr.f32.mxu0 0.0
  %244 = vmatmul.mubr.f32.gmra.mrb[0].mxu0 %v107
  %v245 = vpop.f32.mrb[0].mxu0
  %v246 = vadd.f32 0.0, %v245
  %v247 = vpop.f32.mrb[0].mxu0
  %248 = vmatprep.mubr.f32.mxu0 0.0
  %249 = vmatmul.mubr.f32.gmra.mrb[0].mxu0 %v108
  %v250 = vpop.f32.mrb[0].mxu0
  %v251 = vadd.f32 0.0, %v250
  %v252 = vpop.f32.mrb[0].mxu0
  %253 = vdwg.mxu0
  %v254 = vadd.f32 %v61, %v176
  %v255 = vadd.f32 %v62, %v181
  %v256 = vadd.f32 %v63, %v186
  %v257 = vadd.f32 %v64, %v191
  %v258 = vadd.f32 %v65, %v196
  %v259 = vadd.f32 %v66, %v201
  %v260 = vadd.f32 %v67, %v206
  %v261 = vadd.f32 %v68, %v211
  %v262 = vadd.f32 %v69, %v216
  %v263 = vadd.f32 %v70, %v221
  %v264 = vadd.f32 %v71, %v226
  %v265 = vadd.f32 %v72, %v231
  %v266 = vadd.f32 %v73, %v236
  %v267 = vadd.f32 %v74, %v241
  %v268 = vadd.f32 %v75, %v246
  %v269 = vadd.f32 %v76, %v251
  %270 = vst [vmem:[#allocation2] sm:$0xff] %v254
  %271 = vst [vmem:[#allocation2 + $0x8] sm:$0xff] %v255
  %272 = vst [vmem:[#allocation2 + $0x10] sm:$0xff] %v256
  %273 = vst [vmem:[#allocation2 + $0x18] sm:$0xff] %v257
  %274 = vst [vmem:[#allocation2 + $0x20] sm:$0xff] %v258
  %275 = vst [vmem:[#allocation2 + $0x28] sm:$0xff] %v259
  %276 = vst [vmem:[#allocation2 + $0x30] sm:$0xff] %v260
  %277 = vst [vmem:[#allocation2 + $0x38] sm:$0xff] %v261
  %278 = vst [vmem:[#allocation2 + $0x40] sm:$0xff] %v262
  %279 = vst [vmem:[#allocation2 + $0x48] sm:$0xff] %v263
  %280 = vst [vmem:[#allocation2 + $0x50] sm:$0xff] %v264
  %281 = vst [vmem:[#allocation2 + $0x58] sm:$0xff] %v265
  %282 = vst [vmem:[#allocation2 + $0x60] sm:$0xff] %v266
  %283 = vst [vmem:[#allocation2 + $0x68] sm:$0xff] %v267
  %284 = vst [vmem:[#allocation2 + $0x70] sm:$0xff] %v268
  %285 = vst [vmem:[#allocation2 + $0x78] sm:$0xff] %v269
  // Predicated region
  $region30: #{gno_forward.4} parent=0 // pred_check
    %p286 = pneg %p23
  $region31: #{gno_forward.4} parent=0 // pred_check_branch
    %288 = sbr.rel (%p286) target = $region33
  $region32: #{gno_forward.4} parent=0 // pred_region
    %v289 = vld [vmem:[#allocation2] sm:$0xff]
    %v290 = vld [vmem:[#allocation2 + $0x8] sm:$0xff]
    %v291 = vld [vmem:[#allocation2 + $0x10] sm:$0xff]
    %v292 = vld [vmem:[#allocation2 + $0x18] sm:$0xff]
    %v293 = vld [vmem:[#allocation2 + $0x20] sm:$0xff]
    %v294 = vld [vmem:[#allocation2 + $0x28] sm:$0xff]
    %v295 = vld [vmem:[#allocation2 + $0x30] sm:$0xff]
    %v296 = vld [vmem:[#allocation2 + $0x38] sm:$0xff]
    %v297 = vld [vmem:[#allocation2 + $0x40] sm:$0xff]
    %v298 = vld [vmem:[#allocation2 + $0x48] sm:$0xff]
    %v299 = vld [vmem:[#allocation2 + $0x50] sm:$0xff]
    %v300 = vld [vmem:[#allocation2 + $0x58] sm:$0xff]
    %v301 = vld [vmem:[#allocation2 + $0x60] sm:$0xff]
    %v302 = vld [vmem:[#allocation2 + $0x68] sm:$0xff]
    %v303 = vld [vmem:[#allocation2 + $0x70] sm:$0xff]
    %v304 = vld [vmem:[#allocation2 + $0x78] sm:$0xff]
    %v305 = vld [vmem:[%s2] sm:$0x1]
    %v307 = vlaneseq
    %v308 = vshrl.u32 %v307, 7
    %v309 = vsub.s32 0, %v308
    %v310 = vrot.slane %v305, %v309
    %v312 = vadd.f32 %v289, %v310
    %v313 = vadd.f32 %v290, %v310
    %v314 = vadd.f32 %v291, %v310
    %v315 = vadd.f32 %v292, %v310
    %v316 = vadd.f32 %v293, %v310
    %v317 = vadd.f32 %v294, %v310
    %v318 = vadd.f32 %v295, %v310
    %v319 = vadd.f32 %v296, %v310
    %v320 = vadd.f32 %v297, %v310
    %v321 = vadd.f32 %v298, %v310
    %v322 = vadd.f32 %v299, %v310
    %v323 = vadd.f32 %v300, %v310
    %v324 = vadd.f32 %v301, %v310
    %v325 = vadd.f32 %v302, %v310
    %v326 = vadd.f32 %v303, %v310
    %v327 = vadd.f32 %v304, %v310
    %v328 = vmul.f32 %v312, 0.5
    %v329 = vmul.f32 %v313, 0.5
    %v330 = vmul.f32 %v314, 0.5
    %v331 = vmul.f32 %v315, 0.5
    %v332 = vmul.f32 %v316, 0.5
    %v333 = vmul.f32 %v317, 0.5
    %v334 = vmul.f32 %v318, 0.5
    %v335 = vmul.f32 %v319, 0.5
    %v336 = vmul.f32 %v320, 0.5
    %v337 = vmul.f32 %v321, 0.5
    %v338 = vmul.f32 %v322, 0.5
    %v339 = vmul.f32 %v323, 0.5
    %v340 = vmul.f32 %v324, 0.5
    %v341 = vmul.f32 %v325, 0.5
    %v342 = vmul.f32 %v326, 0.5
    %v343 = vmul.f32 %v327, 0.5
    %v344 = vmul.f32 %v312, 0.044715
    %v345 = vmul.f32 %v313, 0.044715
    %v346 = vmul.f32 %v314, 0.044715
    %v347 = vmul.f32 %v315, 0.044715
    %v348 = vmul.f32 %v316, 0.044715
    %v349 = vmul.f32 %v317, 0.044715
    %v350 = vmul.f32 %v318, 0.044715
    %v351 = vmul.f32 %v319, 0.044715
    %v352 = vmul.f32 %v320, 0.044715
    %v353 = vmul.f32 %v321, 0.044715
    %v354 = vmul.f32 %v322, 0.044715
    %v355 = vmul.f32 %v323, 0.044715
    %v356 = vmul.f32 %v324, 0.044715
    %v357 = vmul.f32 %v325, 0.044715
    %v358 = vmul.f32 %v326, 0.044715
    %v359 = vmul.f32 %v327, 0.044715
    %v360 = vmul.f32 %v344, %v312
    %v361 = vmul.f32 %v345, %v313
    %v362 = vmul.f32 %v346, %v314
    %v363 = vmul.f32 %v347, %v315
    %v364 = vmul.f32 %v348, %v316
    %v365 = vmul.f32 %v349, %v317
    %v366 = vmul.f32 %v350, %v318
    %v367 = vmul.f32 %v351, %v319
    %v368 = vmul.f32 %v352, %v320
    %v369 = vmul.f32 %v353, %v321
    %v370 = vmul.f32 %v354, %v322
    %v371 = vmul.f32 %v355, %v323
    %v372 = vmul.f32 %v356, %v324
    %v373 = vmul.f32 %v357, %v325
    %v374 = vmul.f32 %v358, %v326
    %v375 = vmul.f32 %v359, %v327
    %v376 = vmul.f32 %v360, %v312
    %v377 = vmul.f32 %v361, %v313
    %v378 = vmul.f32 %v362, %v314
    %v379 = vmul.f32 %v363, %v315
    %v380 = vmul.f32 %v364, %v316
    %v381 = vmul.f32 %v365, %v317
    %v382 = vmul.f32 %v366, %v318
    %v383 = vmul.f32 %v367, %v319
    %v384 = vmul.f32 %v368, %v320
    %v385 = vmul.f32 %v369, %v321
    %v386 = vmul.f32 %v370, %v322
    %v387 = vmul.f32 %v371, %v323
    %v388 = vmul.f32 %v372, %v324
    %v389 = vmul.f32 %v373, %v325
    %v390 = vmul.f32 %v374, %v326
    %v391 = vmul.f32 %v375, %v327
    %v392 = vadd.f32 %v312, %v376
    %v393 = vadd.f32 %v313, %v377
    %v394 = vadd.f32 %v314, %v378
    %v395 = vadd.f32 %v315, %v379
    %v396 = vadd.f32 %v316, %v380
    %v397 = vadd.f32 %v317, %v381
    %v398 = vadd.f32 %v318, %v382
    %v399 = vadd.f32 %v319, %v383
    %v400 = vadd.f32 %v320, %v384
    %v401 = vadd.f32 %v321, %v385
    %v402 = vadd.f32 %v322, %v386
    %v403 = vadd.f32 %v323, %v387
    %v404 = vadd.f32 %v324, %v388
    %v405 = vadd.f32 %v325, %v389
    %v406 = vadd.f32 %v326, %v390
    %v407 = vadd.f32 %v327, %v391
    %v408 = vmul.f32 %v392, 0.7978846
    %v409 = vmul.f32 %v393, 0.7978846
    %v410 = vmul.f32 %v394, 0.7978846
    %v411 = vmul.f32 %v395, 0.7978846
    %v412 = vmul.f32 %v396, 0.7978846
    %v413 = vmul.f32 %v397, 0.7978846
    %v414 = vmul.f32 %v398, 0.7978846
    %v415 = vmul.f32 %v399, 0.7978846
    %v416 = vmul.f32 %v400, 0.7978846
    %v417 = vmul.f32 %v401, 0.7978846
    %v418 = vmul.f32 %v402, 0.7978846
    %v419 = vmul.f32 %v403, 0.7978846
    %v420 = vmul.f32 %v404, 0.7978846
    %v421 = vmul.f32 %v405, 0.7978846
    %v422 = vmul.f32 %v406, 0.7978846
    %v423 = vmul.f32 %v407, 0.7978846
    %v424 = vtanh.pop %v408
    %v425 = vtanh.pop %v409
    %v426 = vtanh.pop %v410
    %v427 = vtanh.pop %v411
    %v428 = vtanh.pop %v412
    %v429 = vtanh.pop %v413
    %v430 = vtanh.pop %v414
    %v431 = vtanh.pop %v415
    %v432 = vtanh.pop %v416
    %v433 = vtanh.pop %v417
    %v434 = vtanh.pop %v418
    %v435 = vtanh.pop %v419
    %v436 = vtanh.pop %v420
    %v437 = vtanh.pop %v421
    %v438 = vtanh.pop %v422
    %v439 = vtanh.pop %v423
    %v440 = vadd.f32 %v424, 1.0
    %v441 = vadd.f32 %v425, 1.0
    %v442 = vadd.f32 %v426, 1.0
    %v443 = vadd.f32 %v427, 1.0
    %v444 = vadd.f32 %v428, 1.0
    %v445 = vadd.f32 %v429, 1.0
    %v446 = vadd.f32 %v430, 1.0
    %v447 = vadd.f32 %v431, 1.0
    %v448 = vadd.f32 %v432, 1.0
    %v449 = vadd.f32 %v433, 1.0
    %v450 = vadd.f32 %v434, 1.0
    %v451 = vadd.f32 %v435, 1.0
    %v452 = vadd.f32 %v436, 1.0
    %v453 = vadd.f32 %v437, 1.0
    %v454 = vadd.f32 %v438, 1.0
    %v455 = vadd.f32 %v439, 1.0
    %v456 = vmul.f32 %v328, %v440
    %v457 = vmul.f32 %v329, %v441
    %v458 = vmul.f32 %v330, %v442
    %v459 = vmul.f32 %v331, %v443
    %v460 = vmul.f32 %v332, %v444
    %v461 = vmul.f32 %v333, %v445
    %v462 = vmul.f32 %v334, %v446
    %v463 = vmul.f32 %v335, %v447
    %v464 = vmul.f32 %v336, %v448
    %v465 = vmul.f32 %v337, %v449
    %v466 = vmul.f32 %v338, %v450
    %v467 = vmul.f32 %v339, %v451
    %v468 = vmul.f32 %v340, %v452
    %v469 = vmul.f32 %v341, %v453
    %v470 = vmul.f32 %v342, %v454
    %v471 = vmul.f32 %v343, %v455
    %v472 = vld [vmem:[%s3] sm:$0x1]
    %v473 = vld [vmem:[%s4] sm:$0x1]
    %474 = vadd.xlane.f32.xlu0 %v456
    %v475 = vpop.xlane.xlu0 %474
    %476 = vadd.xlane.f32.xlu0 %v457
    %v477 = vpop.xlane.xlu0 %476
    %478 = vadd.xlane.f32.xlu0 %v458
    %v479 = vpop.xlane.xlu0 %478
    %480 = vadd.xlane.f32.xlu0 %v459
    %v481 = vpop.xlane.xlu0 %480
    %482 = vadd.xlane.f32.xlu0 %v460
    %v483 = vpop.xlane.xlu0 %482
    %484 = vadd.xlane.f32.xlu0 %v461
    %v485 = vpop.xlane.xlu0 %484
    %486 = vadd.xlane.f32.xlu0 %v462
    %v487 = vpop.xlane.xlu0 %486
    %488 = vadd.xlane.f32.xlu0 %v463
    %v489 = vpop.xlane.xlu0 %488
    %490 = vadd.xlane.f32.xlu0 %v464
    %v491 = vpop.xlane.xlu0 %490
    %492 = vadd.xlane.f32.xlu0 %v465
    %v493 = vpop.xlane.xlu0 %492
    %494 = vadd.xlane.f32.xlu0 %v466
    %v495 = vpop.xlane.xlu0 %494
    %496 = vadd.xlane.f32.xlu0 %v467
    %v497 = vpop.xlane.xlu0 %496
    %498 = vadd.xlane.f32.xlu0 %v468
    %v499 = vpop.xlane.xlu0 %498
    %500 = vadd.xlane.f32.xlu0 %v469
    %v501 = vpop.xlane.xlu0 %500
    %502 = vadd.xlane.f32.xlu0 %v470
    %v503 = vpop.xlane.xlu0 %502
    %504 = vadd.xlane.f32.xlu0 %v471
    %v505 = vpop.xlane.xlu0 %504
    %v506 = vrcp.pop 128.0
    %v507 = vmul.f32 %v475, %v506
    %v508 = vmul.f32 %v477, %v506
    %v509 = vmul.f32 %v479, %v506
    %v510 = vmul.f32 %v481, %v506
    %v511 = vmul.f32 %v483, %v506
    %v512 = vmul.f32 %v485, %v506
    %v513 = vmul.f32 %v487, %v506
    %v514 = vmul.f32 %v489, %v506
    %v515 = vmul.f32 %v491, %v506
    %v516 = vmul.f32 %v493, %v506
    %v517 = vmul.f32 %v495, %v506
    %v518 = vmul.f32 %v497, %v506
    %v519 = vmul.f32 %v499, %v506
    %v520 = vmul.f32 %v501, %v506
    %v521 = vmul.f32 %v503, %v506
    %v522 = vmul.f32 %v505, %v506
    %v523 = vsub.f32 %v456, %v507
    %v524 = vsub.f32 %v457, %v508
    %v525 = vsub.f32 %v458, %v509
    %v526 = vsub.f32 %v459, %v510
    %v527 = vsub.f32 %v460, %v511
    %v528 = vsub.f32 %v461, %v512
    %v529 = vsub.f32 %v462, %v513
    %v530 = vsub.f32 %v463, %v514
    %v531 = vsub.f32 %v464, %v515
    %v532 = vsub.f32 %v465, %v516
    %v533 = vsub.f32 %v466, %v517
    %v534 = vsub.f32 %v467, %v518
    %v535 = vsub.f32 %v468, %v519
    %v536 = vsub.f32 %v469, %v520
    %v537 = vsub.f32 %v470, %v521
    %v538 = vsub.f32 %v471, %v522
    %v539 = vmul.f32 %v523, %v523
    %v540 = vmul.f32 %v524, %v524
    %v541 = vmul.f32 %v525, %v525
    %v542 = vmul.f32 %v526, %v526
    %v543 = vmul.f32 %v527, %v527
    %v544 = vmul.f32 %v528, %v528
    %v545 = vmul.f32 %v529, %v529
    %v546 = vmul.f32 %v530, %v530
    %v547 = vmul.f32 %v531, %v531
    %v548 = vmul.f32 %v532, %v532
    %v549 = vmul.f32 %v533, %v533
    %v550 = vmul.f32 %v534, %v534
    %v551 = vmul.f32 %v535, %v535
    %v552 = vmul.f32 %v536, %v536
    %v553 = vmul.f32 %v537, %v537
    %v554 = vmul.f32 %v538, %v538
    %555 = vadd.xlane.f32.xlu0 %v539
    %v556 = vpop.xlane.xlu0 %555
    %557 = vadd.xlane.f32.xlu0 %v540
    %v558 = vpop.xlane.xlu0 %557
    %559 = vadd.xlane.f32.xlu0 %v541
    %v560 = vpop.xlane.xlu0 %559
    %561 = vadd.xlane.f32.xlu0 %v542
    %v562 = vpop.xlane.xlu0 %561
    %563 = vadd.xlane.f32.xlu0 %v543
    %v564 = vpop.xlane.xlu0 %563
    %565 = vadd.xlane.f32.xlu0 %v544
    %v566 = vpop.xlane.xlu0 %565
    %567 = vadd.xlane.f32.xlu0 %v545
    %v568 = vpop.xlane.xlu0 %567
    %569 = vadd.xlane.f32.xlu0 %v546
    %v570 = vpop.xlane.xlu0 %569
    %571 = vadd.xlane.f32.xlu0 %v547
    %v572 = vpop.xlane.xlu0 %571
    %573 = vadd.xlane.f32.xlu0 %v548
    %v574 = vpop.xlane.xlu0 %573
    %575 = vadd.xlane.f32.xlu0 %v549
    %v576 = vpop.xlane.xlu0 %575
    %577 = vadd.xlane.f32.xlu0 %v550
    %v578 = vpop.xlane.xlu0 %577
    %579 = vadd.xlane.f32.xlu0 %v551
    %v580 = vpop.xlane.xlu0 %579
    %581 = vadd.xlane.f32.xlu0 %v552
    %v582 = vpop.xlane.xlu0 %581
    %583 = vadd.xlane.f32.xlu0 %v553
    %v584 = vpop.xlane.xlu0 %583
    %585 = vadd.xlane.f32.xlu0 %v554
    %v586 = vpop.xlane.xlu0 %585
    %v587 = vmul.f32 %v556, %v506
    %v588 = vmul.f32 %v558, %v506
    %v589 = vmul.f32 %v560, %v506
    %v590 = vmul.f32 %v562, %v506
    %v591 = vmul.f32 %v564, %v506
    %v592 = vmul.f32 %v566, %v506
    %v593 = vmul.f32 %v568, %v506
    %v594 = vmul.f32 %v570, %v506
    %v595 = vmul.f32 %v572, %v506
    %v596 = vmul.f32 %v574, %v506
    %v597 = vmul.f32 %v576, %v506
    %v598 = vmul.f32 %v578, %v506
    %v599 = vmul.f32 %v580, %v506
    %v600 = vmul.f32 %v582, %v506
    %v601 = vmul.f32 %v584, %v506
    %v602 = vmul.f32 %v586, %v506
    %v603 = vadd.f32 %v587, 1e-05
    %v604 = vadd.f32 %v588, 1e-05
    %v605 = vadd.f32 %v589, 1e-05
    %v606 = vadd.f32 %v590, 1e-05
    %v607 = vadd.f32 %v591, 1e-05
    %v608 = vadd.f32 %v592, 1e-05
    %v609 = vadd.f32 %v593, 1e-05
    %v610 = vadd.f32 %v594, 1e-05
    %v611 = vadd.f32 %v595, 1e-05
    %v612 = vadd.f32 %v596, 1e-05
    %v613 = vadd.f32 %v597, 1e-05
    %v614 = vadd.f32 %v598, 1e-05
    %v615 = vadd.f32 %v599, 1e-05
    %v616 = vadd.f32 %v600, 1e-05
    %v617 = vadd.f32 %v601, 1e-05
    %v618 = vadd.f32 %v602, 1e-05
    %v619 = vrsqrt.pop %v603
    %v620 = vrsqrt.pop %v604
    %v621 = vrsqrt.pop %v605
    %v622 = vrsqrt.pop %v606
    %v623 = vrsqrt.pop %v607
    %v624 = vrsqrt.pop %v608
    %v625 = vrsqrt.pop %v609
    %v626 = vrsqrt.pop %v610
    %v627 = vrsqrt.pop %v611
    %v628 = vrsqrt.pop %v612
    %v629 = vrsqrt.pop %v613
    %v630 = vrsqrt.pop %v614
    %v631 = vrsqrt.pop %v615
    %v632 = vrsqrt.pop %v616
    %v633 = vrsqrt.pop %v617
    %v634 = vrsqrt.pop %v618
    %v635 = vmul.f32 %v523, %v619
    %v636 = vmul.f32 %v524, %v620
    %v637 = vmul.f32 %v525, %v621
    %v638 = vmul.f32 %v526, %v622
    %v639 = vmul.f32 %v527, %v623
    %v640 = vmul.f32 %v528, %v624
    %v641 = vmul.f32 %v529, %v625
    %v642 = vmul.f32 %v530, %v626
    %v643 = vmul.f32 %v531, %v627
    %v644 = vmul.f32 %v532, %v628
    %v645 = vmul.f32 %v533, %v629
    %v646 = vmul.f32 %v534, %v630
    %v647 = vmul.f32 %v535, %v631
    %v648 = vmul.f32 %v536, %v632
    %v649 = vmul.f32 %v537, %v633
    %v650 = vmul.f32 %v538, %v634
    %v652 = vlaneseq
    %v653 = vshrl.u32 %v652, 7
    %v654 = vsub.s32 0, %v653
    %v655 = vrot.slane %v472, %v654
    %v657 = vmul.f32 %v635, %v655
    %v658 = vmul.f32 %v636, %v655
    %v659 = vmul.f32 %v637, %v655
    %v660 = vmul.f32 %v638, %v655
    %v661 = vmul.f32 %v639, %v655
    %v662 = vmul.f32 %v640, %v655
    %v663 = vmul.f32 %v641, %v655
    %v664 = vmul.f32 %v642, %v655
    %v665 = vmul.f32 %v643, %v655
    %v666 = vmul.f32 %v644, %v655
    %v667 = vmul.f32 %v645, %v655
    %v668 = vmul.f32 %v646, %v655
    %v669 = vmul.f32 %v647, %v655
    %v670 = vmul.f32 %v648, %v655
    %v671 = vmul.f32 %v649, %v655
    %v672 = vmul.f32 %v650, %v655
    %v674 = vlaneseq
    %v675 = vshrl.u32 %v674, 7
    %v676 = vsub.s32 0, %v675
    %v677 = vrot.slane %v473, %v676
    %v679 = vadd.f32 %v657, %v677
    %v680 = vadd.f32 %v658, %v677
    %v681 = vadd.f32 %v659, %v677
    %v682 = vadd.f32 %v660, %v677
    %v683 = vadd.f32 %v661, %v677
    %v684 = vadd.f32 %v662, %v677
    %v685 = vadd.f32 %v663, %v677
    %v686 = vadd.f32 %v664, %v677
    %v687 = vadd.f32 %v665, %v677
    %v688 = vadd.f32 %v666, %v677
    %v689 = vadd.f32 %v667, %v677
    %v690 = vadd.f32 %v668, %v677
    %v691 = vadd.f32 %v669, %v677
    %v692 = vadd.f32 %v670, %v677
    %v693 = vadd.f32 %v671, %v677
    %v694 = vadd.f32 %v672, %v677
    %v695 = vld [vmem:[%s5] sm:$0xff]
    %v696 = vld [vmem:[%s5 + $0x8] sm:$0xff]
    %v697 = vld [vmem:[%s5 + $0x10] sm:$0xff]
    %v698 = vld [vmem:[%s5 + $0x18] sm:$0xff]
    %v699 = vld [vmem:[%s5 + $0x20] sm:$0xff]
    %v700 = vld [vmem:[%s5 + $0x28] sm:$0xff]
    %v701 = vld [vmem:[%s5 + $0x30] sm:$0xff]
    %v702 = vld [vmem:[%s5 + $0x38] sm:$0xff]
    %v703 = vld [vmem:[%s5 + $0x40] sm:$0xff]
    %v704 = vld [vmem:[%s5 + $0x48] sm:$0xff]
    %v705 = vld [vmem:[%s5 + $0x50] sm:$0xff]
    %v706 = vld [vmem:[%s5 + $0x58] sm:$0xff]
    %v707 = vld [vmem:[%s5 + $0x60] sm:$0xff]
    %v708 = vld [vmem:[%s5 + $0x68] sm:$0xff]
    %v709 = vld [vmem:[%s5 + $0x70] sm:$0xff]
    %v710 = vld [vmem:[%s5 + $0x78] sm:$0xff]
    %711 = vmatprep.subr.mxu0 0.0
    %712 = vmatpush1.msra.mxu0 %v695
    %713 = vmatprep.subr.mxu0 0.0
    %714 = vmatpush1.msra.mxu0 %v696
    %715 = vmatprep.subr.mxu0 0.0
    %716 = vmatpush1.msra.mxu0 %v697
    %717 = vmatprep.subr.mxu0 0.0
    %718 = vmatpush1.msra.mxu0 %v698
    %719 = vmatprep.subr.mxu0 0.0
    %720 = vmatpush1.msra.mxu0 %v699
    %721 = vmatprep.subr.mxu0 0.0
    %722 = vmatpush1.msra.mxu0 %v700
    %723 = vmatprep.subr.mxu0 0.0
    %724 = vmatpush1.msra.mxu0 %v701
    %725 = vmatprep.subr.mxu0 0.0
    %726 = vmatpush1.msra.mxu0 %v702
    %727 = vmatprep.subr.mxu0 0.0
    %728 = vmatpush1.msra.mxu0 %v703
    %729 = vmatprep.subr.mxu0 0.0
    %730 = vmatpush1.msra.mxu0 %v704
    %731 = vmatprep.subr.mxu0 0.0
    %732 = vmatpush1.msra.mxu0 %v705
    %733 = vmatprep.subr.mxu0 0.0
    %734 = vmatpush1.msra.mxu0 %v706
    %735 = vmatprep.subr.mxu0 0.0
    %736 = vmatpush1.msra.mxu0 %v707
    %737 = vmatprep.subr.mxu0 0.0
    %738 = vmatpush1.msra.mxu0 %v708
    %739 = vmatprep.subr.mxu0 0.0
    %740 = vmatpush1.msra.mxu0 %v709
    %741 = vmatprep.subr.mxu0 0.0
    %742 = vmatpush1.msra.mxu0 %v710
    %743 = vmatprep.subr.mxu0 0.0
    %744 = vmatpush1.msra.mxu0 0.0
    %745 = vmatprep.subr.mxu0 0.0
    %746 = vmatpush1.msra.mxu0 0.0
    %747 = vmatprep.subr.mxu0 0.0
    %748 = vmatpush1.msra.mxu0 0.0
    %749 = vmatprep.subr.mxu0 0.0
    %750 = vmatpush1.msra.mxu0 0.0
    %751 = vmatprep.subr.mxu0 0.0
    %752 = vmatpush1.msra.mxu0 0.0
    %753 = vmatprep.subr.mxu0 0.0
    %754 = vmatpush1.msra.mxu0 0.0
    %755 = vmatprep.subr.mxu0 0.0
    %756 = vmatpush1.msra.mxu0 0.0
    %757 = vmatprep.subr.mxu0 0.0
    %758 = vmatpush1.msra.mxu0 0.0
    %759 = vmatprep.subr.mxu0 0.0
    %760 = vmatpush1.msra.mxu0 0.0
    %761 = vmatprep.subr.mxu0 0.0
    %762 = vmatpush1.msra.mxu0 0.0
    %763 = vmatprep.subr.mxu0 0.0
    %764 = vmatpush1.msra.mxu0 0.0
    %765 = vmatprep.subr.mxu0 0.0
    %766 = vmatpush1.msra.mxu0 0.0
    %767 = vmatprep.subr.mxu0 0.0
    %768 = vmatpush1.msra.mxu0 0.0
    %769 = vmatprep.subr.mxu0 0.0
    %770 = vmatpush1.msra.mxu0 0.0
    %771 = vmatprep.subr.mxu0 0.0
    %772 = vmatpush1.msra.mxu0 0.0
    %773 = vmatprep.subr.mxu0 0.0
    %774 = vmatpush1.msra.mxu0 0.0
    %775 = vmatprep.mubr.f32.mxu0 0.0
    %776 = vmatmul.mubr.f32.gmra.mrb[0].mxu0 %v679
    %v777 = vpop.f32.mrb[0].mxu0
    %v778 = vadd.f32 0.0, %v777
    %v779 = vpop.f32.mrb[0].mxu0
    %780 = vmatprep.mubr.f32.mxu0 0.0
    %781 = vmatmul.mubr.f32.gmra.mrb[0].mxu0 %v680
    %v782 = vpop.f32.mrb[0].mxu0
    %v783 = vadd.f32 0.0, %v782
    %v784 = vpop.f32.mrb[0].mxu0
    %785 = vmatprep.mubr.f32.mxu0 0.0
    %786 = vmatmul.mubr.f32.gmra.mrb[0].mxu0 %v681
    %v787 = vpop.f32.mrb[0].mxu0
    %v788 = vadd.f32 0.0, %v787
    %v789 = vpop.f32.mrb[0].mxu0
    %790 = vmatprep.mubr.f32.mxu0 0.0
    %791 = vmatmul.mubr.f32.gmra.mrb[0].mxu0 %v682
    %v792 = vpop.f32.mrb[0].mxu0
    %v793 = vadd.f32 0.0, %v792
    %v794 = vpop.f32.mrb[0].mxu0
    %795 = vmatprep.mubr.f32.mxu0 0.0
    %796 = vmatmul.mubr.f32.gmra.mrb[0].mxu0 %v683
    %v797 = vpop.f32.mrb[0].mxu0
    %v798 = vadd.f32 0.0, %v797
    %v799 = vpop.f32.mrb[0].mxu0
    %800 = vmatprep.mubr.f32.mxu0 0.0
    %801 = vmatmul.mubr.f32.gmra.mrb[0].mxu0 %v684
    %v802 = vpop.f32.mrb[0].mxu0
    %v803 = vadd.f32 0.0, %v802
    %v804 = vpop.f32.mrb[0].mxu0
    %805 = vmatprep.mubr.f32.mxu0 0.0
    %806 = vmatmul.mubr.f32.gmra.mrb[0].mxu0 %v685
    %v807 = vpop.f32.mrb[0].mxu0
    %v808 = vadd.f32 0.0, %v807
    %v809 = vpop.f32.mrb[0].mxu0
    %810 = vmatprep.mubr.f32.mxu0 0.0
    %811 = vmatmul.mubr.f32.gmra.mrb[0].mxu0 %v686
    %v812 = vpop.f32.mrb[0].mxu0
    %v813 = vadd.f32 0.0, %v812
    %v814 = vpop.f32.mrb[0].mxu0
    %815 = vmatprep.mubr.f32.mxu0 0.0
    %816 = vmatmul.mubr.f32.gmra.mrb[0].mxu0 %v687
    %v817 = vpop.f32.mrb[0].mxu0
    %v818 = vadd.f32 0.0, %v817
    %v819 = vpop.f32.mrb[0].mxu0
    %820 = vmatprep.mubr.f32.mxu0 0.0
    %821 = vmatmul.mubr.f32.gmra.mrb[0].mxu0 %v688
    %v822 = vpop.f32.mrb[0].mxu0
    %v823 = vadd.f32 0.0, %v822
    %v824 = vpop.f32.mrb[0].mxu0
    %825 = vmatprep.mubr.f32.mxu0 0.0
    %826 = vmatmul.mubr.f32.gmra.mrb[0].mxu0 %v689
    %v827 = vpop.f32.mrb[0].mxu0
    %v828 = vadd.f32 0.0, %v827
    %v829 = vpop.f32.mrb[0].mxu0
    %830 = vmatprep.mubr.f32.mxu0 0.0
    %831 = vmatmul.mubr.f32.gmra.mrb[0].mxu0 %v690
    %v832 = vpop.f32.mrb[0].mxu0
    %v833 = vadd.f32 0.0, %v832
    %v834 = vpop.f32.mrb[0].mxu0
    %835 = vmatprep.mubr.f32.mxu0 0.0
    %836 = vmatmul.mubr.f32.gmra.mrb[0].mxu0 %v691
    %v837 = vpop.f32.mrb[0].mxu0
    %v838 = vadd.f32 0.0, %v837
    %v839 = vpop.f32.mrb[0].mxu0
    %840 = vmatprep.mubr.f32.mxu0 0.0
    %841 = vmatmul.mubr.f32.gmra.mrb[0].mxu0 %v692
    %v842 = vpop.f32.mrb[0].mxu0
    %v843 = vadd.f32 0.0, %v842
    %v844 = vpop.f32.mrb[0].mxu0
    %845 = vmatprep.mubr.f32.mxu0 0.0
    %846 = vmatmul.mubr.f32.gmra.mrb[0].mxu0 %v693
    %v847 = vpop.f32.mrb[0].mxu0
    %v848 = vadd.f32 0.0, %v847
    %v849 = vpop.f32.mrb[0].mxu0
    %850 = vmatprep.mubr.f32.mxu0 0.0
    %851 = vmatmul.mubr.f32.gmra.mrb[0].mxu0 %v694
    %v852 = vpop.f32.mrb[0].mxu0
    %v853 = vadd.f32 0.0, %v852
    %v854 = vpop.f32.mrb[0].mxu0
    %855 = vdwg.mxu0
    %856 = vst [vmem:[%s6] sm:$0xff] %v778
    %857 = vst [vmem:[%s6 + $0x8] sm:$0xff] %v783
    %858 = vst [vmem:[%s6 + $0x10] sm:$0xff] %v788
    %859 = vst [vmem:[%s6 + $0x18] sm:$0xff] %v793
    %860 = vst [vmem:[%s6 + $0x20] sm:$0xff] %v798
    %861 = vst [vmem:[%s6 + $0x28] sm:$0xff] %v803
    %862 = vst [vmem:[%s6 + $0x30] sm:$0xff] %v808
    %863 = vst [vmem:[%s6 + $0x38] sm:$0xff] %v813
    %864 = vst [vmem:[%s6 + $0x40] sm:$0xff] %v818
    %865 = vst [vmem:[%s6 + $0x48] sm:$0xff] %v823
    %866 = vst [vmem:[%s6 + $0x50] sm:$0xff] %v828
    %867 = vst [vmem:[%s6 + $0x58] sm:$0xff] %v833
    %868 = vst [vmem:[%s6 + $0x60] sm:$0xff] %v838
    %869 = vst [vmem:[%s6 + $0x68] sm:$0xff] %v843
    %870 = vst [vmem:[%s6 + $0x70] sm:$0xff] %v848
    %871 = vst [vmem:[%s6 + $0x78] sm:$0xff] %v853
  $region33: #{gno_forward.4} parent=0 // pred_fallthru
    _
  // Predicated region
  $region34: #{gno_forward.4} parent=0 // pred_check
    _
  $region35: #{gno_forward.4} parent=0 // pred_check_branch
    %873 = sbr.rel (0) target = $region37
  $region36: #{gno_forward.4} parent=0 // pred_region
    _
  $region37: #{gno_forward.4} parent=0 // pred_fallthru
    _
  // Predicated region
  $region38: #{gno_forward.4} parent=0 // pred_check
    _
  $region39: #{gno_forward.4} parent=0 // pred_check_branch
    %875 = sbr.rel (0) target = $region41
  $region40: #{gno_forward.4} parent=0 // pred_region
    _
  $region41: #{gno_forward.4} parent=0 // pred_fallthru
    _

// kernel: gno_forward.5
$region0: #{gno_forward.5}
  #allocation0 [shape = 'u32[]', space=smem, size = 0x4, offset = 0x4, fixed_abs, tag = 'smem constant byte address 0x4 - core index']
  #allocation1 [shape = 'u32[144,128]{1,0:T(1,128)}', space=vmem, size = 0x12000, scoped, tag = 'internal scratch']
  %s0 = inlined_call_operand.vmem [shape: bf16[128,128], index: 0, kind: input, shape index: {}]
  %s1 = inlined_call_operand.vmem [shape: f32[128,128], index: 1, kind: input, shape index: {}]
  %s2 = inlined_call_operand.vmem [shape: f32[1,128], index: 2, kind: input, shape index: {}]
  %s3 = inlined_call_operand.vmem [shape: f32[128,128], index: 3, kind: output, shape index: {}]
  %s4 = sld [smem:[#allocation0]]
  $region30: #{gno_forward.5} parent=0
    _
  %s6 = ssub.s32 1, %s4
  %s7 = scalar_select 0, %s6, %s4
  // Predicated region
  $region2: #{gno_forward.5} parent=0 // pred_check
    _
  $region3: #{gno_forward.5} parent=0 // pred_check_branch
    %9 = sbr.rel (0) target = $region5
  $region4: #{gno_forward.5} parent=0 // pred_region
    _
  $region5: #{gno_forward.5} parent=0 // pred_fallthru
    _
  // Predicated region
  $region6: #{gno_forward.5} parent=0 // pred_check
    _
  $region7: #{gno_forward.5} parent=0 // pred_check_branch
    %11 = sbr.rel (0) target = $region9
  $region8: #{gno_forward.5} parent=0 // pred_region
    _
  $region9: #{gno_forward.5} parent=0 // pred_fallthru
    _
  // Predicated region
  $region10: #{gno_forward.5} parent=0 // pred_check
    _
  $region11: #{gno_forward.5} parent=0 // pred_check_branch
    %13 = sbr.rel (0) target = $region13
  $region12: #{gno_forward.5} parent=0 // pred_region
    _
  $region13: #{gno_forward.5} parent=0 // pred_fallthru
    _
  %p14 = scmp.eq.s32.totalorder 0, 0
  // Predicated region
  $region14: #{gno_forward.5} parent=0 // pred_check
    %p15 = pneg %p14
  $region15: #{gno_forward.5} parent=0 // pred_check_branch
    %17 = sbr.rel (%p15) target = $region17
  $region16: #{gno_forward.5} parent=0 // pred_region
    %18 = vst [vmem:[%s3] sm:$0xff] 0.0
    %19 = vst [vmem:[%s3 + $0x8] sm:$0xff] 0.0
    %20 = vst [vmem:[%s3 + $0x10] sm:$0xff] 0.0
    %21 = vst [vmem:[%s3 + $0x18] sm:$0xff] 0.0
    %22 = vst [vmem:[%s3 + $0x20] sm:$0xff] 0.0
    %23 = vst [vmem:[%s3 + $0x28] sm:$0xff] 0.0
    %24 = vst [vmem:[%s3 + $0x30] sm:$0xff] 0.0
    %25 = vst [vmem:[%s3 + $0x38] sm:$0xff] 0.0
    %26 = vst [vmem:[%s3 + $0x40] sm:$0xff] 0.0
    %27 = vst [vmem:[%s3 + $0x48] sm:$0xff] 0.0
    %28 = vst [vmem:[%s3 + $0x50] sm:$0xff] 0.0
    %29 = vst [vmem:[%s3 + $0x58] sm:$0xff] 0.0
    %30 = vst [vmem:[%s3 + $0x60] sm:$0xff] 0.0
    %31 = vst [vmem:[%s3 + $0x68] sm:$0xff] 0.0
    %32 = vst [vmem:[%s3 + $0x70] sm:$0xff] 0.0
    %33 = vst [vmem:[%s3 + $0x78] sm:$0xff] 0.0
  $region17: #{gno_forward.5} parent=0 // pred_fallthru
    _
  %s34 = smul.u32 0, 128
  %v35 = vld [vmem:[%s3] sm:$0xff]
  %v36 = vld [vmem:[%s3 + $0x8] sm:$0xff]
  %v37 = vld [vmem:[%s3 + $0x10] sm:$0xff]
  %v38 = vld [vmem:[%s3 + $0x18] sm:$0xff]
  %v39 = vld [vmem:[%s3 + $0x20] sm:$0xff]
  %v40 = vld [vmem:[%s3 + $0x28] sm:$0xff]
  %v41 = vld [vmem:[%s3 + $0x30] sm:$0xff]
  %v42 = vld [vmem:[%s3 + $0x38] sm:$0xff]
  %v43 = vld [vmem:[%s3 + $0x40] sm:$0xff]
  %v44 = vld [vmem:[%s3 + $0x48] sm:$0xff]
  %v45 = vld [vmem:[%s3 + $0x50] sm:$0xff]
  %v46 = vld [vmem:[%s3 + $0x58] sm:$0xff]
  %v47 = vld [vmem:[%s3 + $0x60] sm:$0xff]
  %v48 = vld [vmem:[%s3 + $0x68] sm:$0xff]
  %v49 = vld [vmem:[%s3 + $0x70] sm:$0xff]
  %v50 = vld [vmem:[%s3 + $0x78] sm:$0xff]
  %v51 = vld [vmem:[%s0] sm:$0xf]
  %v52 = vld [vmem:[%s0 + $0x4] sm:$0xf]
  %v53 = vld [vmem:[%s0 + $0x8] sm:$0xf]
  %v54 = vld [vmem:[%s0 + $0xc] sm:$0xf]
  %v55 = vld [vmem:[%s0 + $0x10] sm:$0xf]
  %v56 = vld [vmem:[%s0 + $0x14] sm:$0xf]
  %v57 = vld [vmem:[%s0 + $0x18] sm:$0xf]
  %v58 = vld [vmem:[%s0 + $0x1c] sm:$0xf]
  %v59 = vld [vmem:[%s0 + $0x20] sm:$0xf]
  %v60 = vld [vmem:[%s0 + $0x24] sm:$0xf]
  %v61 = vld [vmem:[%s0 + $0x28] sm:$0xf]
  %v62 = vld [vmem:[%s0 + $0x2c] sm:$0xf]
  %v63 = vld [vmem:[%s0 + $0x30] sm:$0xf]
  %v64 = vld [vmem:[%s0 + $0x34] sm:$0xf]
  %v65 = vld [vmem:[%s0 + $0x38] sm:$0xf]
  %v66 = vld [vmem:[%s0 + $0x3c] sm:$0xf]
  %v67 = vunpack.c.l.bf16 %v51
  %v68 = vunpack.c.l.bf16 %v52
  %v69 = vunpack.c.l.bf16 %v53
  %v70 = vunpack.c.l.bf16 %v54
  %v71 = vunpack.c.l.bf16 %v55
  %v72 = vunpack.c.l.bf16 %v56
  %v73 = vunpack.c.l.bf16 %v57
  %v74 = vunpack.c.l.bf16 %v58
  %v75 = vunpack.c.l.bf16 %v59
  %v76 = vunpack.c.l.bf16 %v60
  %v77 = vunpack.c.l.bf16 %v61
  %v78 = vunpack.c.l.bf16 %v62
  %v79 = vunpack.c.l.bf16 %v63
  %v80 = vunpack.c.l.bf16 %v64
  %v81 = vunpack.c.l.bf16 %v65
  %v82 = vunpack.c.l.bf16 %v66
  %s83 = scalar_lea.vmem %s1, %s34
  %v84 = vld [vmem:[%s83] sm:$0xff]
  %v85 = vld [vmem:[%s83 + $0x8] sm:$0xff]
  %v86 = vld [vmem:[%s83 + $0x10] sm:$0xff]
  %v87 = vld [vmem:[%s83 + $0x18] sm:$0xff]
  %v88 = vld [vmem:[%s83 + $0x20] sm:$0xff]
  %v89 = vld [vmem:[%s83 + $0x28] sm:$0xff]
  %v90 = vld [vmem:[%s83 + $0x30] sm:$0xff]
  %v91 = vld [vmem:[%s83 + $0x38] sm:$0xff]
  %v92 = vld [vmem:[%s83 + $0x40] sm:$0xff]
  %v93 = vld [vmem:[%s83 + $0x48] sm:$0xff]
  %v94 = vld [vmem:[%s83 + $0x50] sm:$0xff]
  %v95 = vld [vmem:[%s83 + $0x58] sm:$0xff]
  %v96 = vld [vmem:[%s83 + $0x60] sm:$0xff]
  %v97 = vld [vmem:[%s83 + $0x68] sm:$0xff]
  %v98 = vld [vmem:[%s83 + $0x70] sm:$0xff]
  %v99 = vld [vmem:[%s83 + $0x78] sm:$0xff]
  %100 = vmatprep.subr.mxu0 0.0
  %101 = vmatpush1.msra.mxu0 %v84
  %102 = vmatprep.subr.mxu0 0.0
  %103 = vmatpush1.msra.mxu0 %v85
  %104 = vmatprep.subr.mxu0 0.0
  %105 = vmatpush1.msra.mxu0 %v86
  %106 = vmatprep.subr.mxu0 0.0
  %107 = vmatpush1.msra.mxu0 %v87
  %108 = vmatprep.subr.mxu0 0.0
  %109 = vmatpush1.msra.mxu0 %v88
  %110 = vmatprep.subr.mxu0 0.0
  %111 = vmatpush1.msra.mxu0 %v89
  %112 = vmatprep.subr.mxu0 0.0
  %113 = vmatpush1.msra.mxu0 %v90
  %114 = vmatprep.subr.mxu0 0.0
  %115 = vmatpush1.msra.mxu0 %v91
  %116 = vmatprep.subr.mxu0 0.0
  %117 = vmatpush1.msra.mxu0 %v92
  %118 = vmatprep.subr.mxu0 0.0
  %119 = vmatpush1.msra.mxu0 %v93
  %120 = vmatprep.subr.mxu0 0.0
  %121 = vmatpush1.msra.mxu0 %v94
  %122 = vmatprep.subr.mxu0 0.0
  %123 = vmatpush1.msra.mxu0 %v95
  %124 = vmatprep.subr.mxu0 0.0
  %125 = vmatpush1.msra.mxu0 %v96
  %126 = vmatprep.subr.mxu0 0.0
  %127 = vmatpush1.msra.mxu0 %v97
  %128 = vmatprep.subr.mxu0 0.0
  %129 = vmatpush1.msra.mxu0 %v98
  %130 = vmatprep.subr.mxu0 0.0
  %131 = vmatpush1.msra.mxu0 %v99
  %132 = vmatprep.subr.mxu0 0.0
  %133 = vmatpush1.msra.mxu0 0.0
  %134 = vmatprep.subr.mxu0 0.0
  %135 = vmatpush1.msra.mxu0 0.0
  %136 = vmatprep.subr.mxu0 0.0
  %137 = vmatpush1.msra.mxu0 0.0
  %138 = vmatprep.subr.mxu0 0.0
  %139 = vmatpush1.msra.mxu0 0.0
  %140 = vmatprep.subr.mxu0 0.0
  %141 = vmatpush1.msra.mxu0 0.0
  %142 = vmatprep.subr.mxu0 0.0
  %143 = vmatpush1.msra.mxu0 0.0
  %144 = vmatprep.subr.mxu0 0.0
  %145 = vmatpush1.msra.mxu0 0.0
  %146 = vmatprep.subr.mxu0 0.0
  %147 = vmatpush1.msra.mxu0 0.0
  %148 = vmatprep.subr.mxu0 0.0
  %149 = vmatpush1.msra.mxu0 0.0
  %150 = vmatprep.subr.mxu0 0.0
  %151 = vmatpush1.msra.mxu0 0.0
  %152 = vmatprep.subr.mxu0 0.0
  %153 = vmatpush1.msra.mxu0 0.0
  %154 = vmatprep.subr.mxu0 0.0
  %155 = vmatpush1.msra.mxu0 0.0
  %156 = vmatprep.subr.mxu0 0.0
  %157 = vmatpush1.msra.mxu0 0.0
  %158 = vmatprep.subr.mxu0 0.0
  %159 = vmatpush1.msra.mxu0 0.0
  %160 = vmatprep.subr.mxu0 0.0
  %161 = vmatpush1.msra.mxu0 0.0
  %162 = vmatprep.subr.mxu0 0.0
  %163 = vmatpush1.msra.mxu0 0.0
  %164 = vmatprep.mubr.f32.mxu0 0.0
  %165 = vmatmul.mubr.f32.gmra.mrb[0].mxu0 %v67
  %v166 = vpop.f32.mrb[0].mxu0
  %v167 = vadd.f32 0.0, %v166
  %v168 = vpop.f32.mrb[0].mxu0
  %169 = vmatprep.mubr.f32.mxu0 0.0
  %170 = vmatmul.mubr.f32.gmra.mrb[0].mxu0 %v68
  %v171 = vpop.f32.mrb[0].mxu0
  %v172 = vadd.f32 0.0, %v171
  %v173 = vpop.f32.mrb[0].mxu0
  %174 = vmatprep.mubr.f32.mxu0 0.0
  %175 = vmatmul.mubr.f32.gmra.mrb[0].mxu0 %v69
  %v176 = vpop.f32.mrb[0].mxu0
  %v177 = vadd.f32 0.0, %v176
  %v178 = vpop.f32.mrb[0].mxu0
  %179 = vmatprep.mubr.f32.mxu0 0.0
  %180 = vmatmul.mubr.f32.gmra.mrb[0].mxu0 %v70
  %v181 = vpop.f32.mrb[0].mxu0
  %v182 = vadd.f32 0.0, %v181
  %v183 = vpop.f32.mrb[0].mxu0
  %184 = vmatprep.mubr.f32.mxu0 0.0
  %185 = vmatmul.mubr.f32.gmra.mrb[0].mxu0 %v71
  %v186 = vpop.f32.mrb[0].mxu0
  %v187 = vadd.f32 0.0, %v186
  %v188 = vpop.f32.mrb[0].mxu0
  %189 = vmatprep.mubr.f32.mxu0 0.0
  %190 = vmatmul.mubr.f32.gmra.mrb[0].mxu0 %v72
  %v191 = vpop.f32.mrb[0].mxu0
  %v192 = vadd.f32 0.0, %v191
  %v193 = vpop.f32.mrb[0].mxu0
  %194 = vmatprep.mubr.f32.mxu0 0.0
  %195 = vmatmul.mubr.f32.gmra.mrb[0].mxu0 %v73
  %v196 = vpop.f32.mrb[0].mxu0
  %v197 = vadd.f32 0.0, %v196
  %v198 = vpop.f32.mrb[0].mxu0
  %199 = vmatprep.mubr.f32.mxu0 0.0
  %200 = vmatmul.mubr.f32.gmra.mrb[0].mxu0 %v74
  %v201 = vpop.f32.mrb[0].mxu0
  %v202 = vadd.f32 0.0, %v201
  %v203 = vpop.f32.mrb[0].mxu0
  %204 = vmatprep.mubr.f32.mxu0 0.0
  %205 = vmatmul.mubr.f32.gmra.mrb[0].mxu0 %v75
  %v206 = vpop.f32.mrb[0].mxu0
  %v207 = vadd.f32 0.0, %v206
  %v208 = vpop.f32.mrb[0].mxu0
  %209 = vmatprep.mubr.f32.mxu0 0.0
  %210 = vmatmul.mubr.f32.gmra.mrb[0].mxu0 %v76
  %v211 = vpop.f32.mrb[0].mxu0
  %v212 = vadd.f32 0.0, %v211
  %v213 = vpop.f32.mrb[0].mxu0
  %214 = vmatprep.mubr.f32.mxu0 0.0
  %215 = vmatmul.mubr.f32.gmra.mrb[0].mxu0 %v77
  %v216 = vpop.f32.mrb[0].mxu0
  %v217 = vadd.f32 0.0, %v216
  %v218 = vpop.f32.mrb[0].mxu0
  %219 = vmatprep.mubr.f32.mxu0 0.0
  %220 = vmatmul.mubr.f32.gmra.mrb[0].mxu0 %v78
  %v221 = vpop.f32.mrb[0].mxu0
  %v222 = vadd.f32 0.0, %v221
  %v223 = vpop.f32.mrb[0].mxu0
  %224 = vmatprep.mubr.f32.mxu0 0.0
  %225 = vmatmul.mubr.f32.gmra.mrb[0].mxu0 %v79
  %v226 = vpop.f32.mrb[0].mxu0
  %v227 = vadd.f32 0.0, %v226
  %v228 = vpop.f32.mrb[0].mxu0
  %229 = vmatprep.mubr.f32.mxu0 0.0
  %230 = vmatmul.mubr.f32.gmra.mrb[0].mxu0 %v80
  %v231 = vpop.f32.mrb[0].mxu0
  %v232 = vadd.f32 0.0, %v231
  %v233 = vpop.f32.mrb[0].mxu0
  %234 = vmatprep.mubr.f32.mxu0 0.0
  %235 = vmatmul.mubr.f32.gmra.mrb[0].mxu0 %v81
  %v236 = vpop.f32.mrb[0].mxu0
  %v237 = vadd.f32 0.0, %v236
  %v238 = vpop.f32.mrb[0].mxu0
  %239 = vmatprep.mubr.f32.mxu0 0.0
  %240 = vmatmul.mubr.f32.gmra.mrb[0].mxu0 %v82
  %v241 = vpop.f32.mrb[0].mxu0
  %v242 = vadd.f32 0.0, %v241
  %v243 = vpop.f32.mrb[0].mxu0
  %244 = vdwg.mxu0
  %v245 = vadd.f32 %v35, %v167
  %v246 = vadd.f32 %v36, %v172
  %v247 = vadd.f32 %v37, %v177
  %v248 = vadd.f32 %v38, %v182
  %v249 = vadd.f32 %v39, %v187
  %v250 = vadd.f32 %v40, %v192
  %v251 = vadd.f32 %v41, %v197
  %v252 = vadd.f32 %v42, %v202
  %v253 = vadd.f32 %v43, %v207
  %v254 = vadd.f32 %v44, %v212
  %v255 = vadd.f32 %v45, %v217
  %v256 = vadd.f32 %v46, %v222
  %v257 = vadd.f32 %v47, %v227
  %v258 = vadd.f32 %v48, %v232
  %v259 = vadd.f32 %v49, %v237
  %v260 = vadd.f32 %v50, %v242
  %261 = vst [vmem:[%s3] sm:$0xff] %v245
  %262 = vst [vmem:[%s3 + $0x8] sm:$0xff] %v246
  %263 = vst [vmem:[%s3 + $0x10] sm:$0xff] %v247
  %264 = vst [vmem:[%s3 + $0x18] sm:$0xff] %v248
  %265 = vst [vmem:[%s3 + $0x20] sm:$0xff] %v249
  %266 = vst [vmem:[%s3 + $0x28] sm:$0xff] %v250
  %267 = vst [vmem:[%s3 + $0x30] sm:$0xff] %v251
  %268 = vst [vmem:[%s3 + $0x38] sm:$0xff] %v252
  %269 = vst [vmem:[%s3 + $0x40] sm:$0xff] %v253
  %270 = vst [vmem:[%s3 + $0x48] sm:$0xff] %v254
  %271 = vst [vmem:[%s3 + $0x50] sm:$0xff] %v255
  %272 = vst [vmem:[%s3 + $0x58] sm:$0xff] %v256
  %273 = vst [vmem:[%s3 + $0x60] sm:$0xff] %v257
  %274 = vst [vmem:[%s3 + $0x68] sm:$0xff] %v258
  %275 = vst [vmem:[%s3 + $0x70] sm:$0xff] %v259
  %276 = vst [vmem:[%s3 + $0x78] sm:$0xff] %v260
  // Predicated region
  $region18: #{gno_forward.5} parent=0 // pred_check
    %p277 = pneg %p14
  $region19: #{gno_forward.5} parent=0 // pred_check_branch
    %279 = sbr.rel (%p277) target = $region21
  $region20: #{gno_forward.5} parent=0 // pred_region
    %v280 = vld [vmem:[%s3] sm:$0xff]
    %v281 = vld [vmem:[%s3 + $0x8] sm:$0xff]
    %v282 = vld [vmem:[%s3 + $0x10] sm:$0xff]
    %v283 = vld [vmem:[%s3 + $0x18] sm:$0xff]
    %v284 = vld [vmem:[%s3 + $0x20] sm:$0xff]
    %v285 = vld [vmem:[%s3 + $0x28] sm:$0xff]
    %v286 = vld [vmem:[%s3 + $0x30] sm:$0xff]
    %v287 = vld [vmem:[%s3 + $0x38] sm:$0xff]
    %v288 = vld [vmem:[%s3 + $0x40] sm:$0xff]
    %v289 = vld [vmem:[%s3 + $0x48] sm:$0xff]
    %v290 = vld [vmem:[%s3 + $0x50] sm:$0xff]
    %v291 = vld [vmem:[%s3 + $0x58] sm:$0xff]
    %v292 = vld [vmem:[%s3 + $0x60] sm:$0xff]
    %v293 = vld [vmem:[%s3 + $0x68] sm:$0xff]
    %v294 = vld [vmem:[%s3 + $0x70] sm:$0xff]
    %v295 = vld [vmem:[%s3 + $0x78] sm:$0xff]
    %v296 = vld [vmem:[%s2] sm:$0x1]
    %v298 = vlaneseq
    %v299 = vshrl.u32 %v298, 7
    %v300 = vsub.s32 0, %v299
    %v301 = vrot.slane %v296, %v300
    %v303 = vadd.f32 %v280, %v301
    %v304 = vadd.f32 %v281, %v301
    %v305 = vadd.f32 %v282, %v301
    %v306 = vadd.f32 %v283, %v301
    %v307 = vadd.f32 %v284, %v301
    %v308 = vadd.f32 %v285, %v301
    %v309 = vadd.f32 %v286, %v301
    %v310 = vadd.f32 %v287, %v301
    %v311 = vadd.f32 %v288, %v301
    %v312 = vadd.f32 %v289, %v301
    %v313 = vadd.f32 %v290, %v301
    %v314 = vadd.f32 %v291, %v301
    %v315 = vadd.f32 %v292, %v301
    %v316 = vadd.f32 %v293, %v301
    %v317 = vadd.f32 %v294, %v301
    %v318 = vadd.f32 %v295, %v301
    %319 = vst [vmem:[%s3] sm:$0xff] %v303
    %320 = vst [vmem:[%s3 + $0x8] sm:$0xff] %v304
    %321 = vst [vmem:[%s3 + $0x10] sm:$0xff] %v305
    %322 = vst [vmem:[%s3 + $0x18] sm:$0xff] %v306
    %323 = vst [vmem:[%s3 + $0x20] sm:$0xff] %v307
    %324 = vst [vmem:[%s3 + $0x28] sm:$0xff] %v308
    %325 = vst [vmem:[%s3 + $0x30] sm:$0xff] %v309
    %326 = vst [vmem:[%s3 + $0x38] sm:$0xff] %v310
    %327 = vst [vmem:[%s3 + $0x40] sm:$0xff] %v311
    %328 = vst [vmem:[%s3 + $0x48] sm:$0xff] %v312
    %329 = vst [vmem:[%s3 + $0x50] sm:$0xff] %v313
    %330 = vst [vmem:[%s3 + $0x58] sm:$0xff] %v314
    %331 = vst [vmem:[%s3 + $0x60] sm:$0xff] %v315
    %332 = vst [vmem:[%s3 + $0x68] sm:$0xff] %v316
    %333 = vst [vmem:[%s3 + $0x70] sm:$0xff] %v317
    %334 = vst [vmem:[%s3 + $0x78] sm:$0xff] %v318
  $region21: #{gno_forward.5} parent=0 // pred_fallthru
    _
  // Predicated region
  $region22: #{gno_forward.5} parent=0 // pred_check
    _
  $region23: #{gno_forward.5} parent=0 // pred_check_branch
    %336 = sbr.rel (0) target = $region25
  $region24: #{gno_forward.5} parent=0 // pred_region
    _
  $region25: #{gno_forward.5} parent=0 // pred_fallthru
    _
  // Predicated region
  $region26: #{gno_forward.5} parent=0 // pred_check
    _
  $region27: #{gno_forward.5} parent=0 // pred_check_branch
    %338 = sbr.rel (0) target = $region29
  $region28: #{gno_forward.5} parent=0 // pred_region
    _
  $region29: #{gno_forward.5} parent=0 // pred_fallthru
    _

</llo_original>
